<compile_context>
chip_gen: v7x
topology: tpu7x:2x2x1
jax: 0.10.0
libtpu: 0.0.40
codegen_flags: <defaults>
</compile_context>

<pallas_src>
import jax
import jax.numpy as jnp
from jax.experimental import pallas as pl
from jax.experimental.pallas import tpu as pltpu

# ---------------- scaled-down config (stands in for rad-dino / DINOv2-base) ----
BATCH = 2
IN_CH = 3               # processor converts X-rays to 3-channel RGB
IMG = 16                # spatial size (small synthetic)
PATCH = 4               # patch size
HIDDEN = 32             # stands in for 768
HEADS = 4
HEAD_DIM = HIDDEN // HEADS
MLP_DIM = 4 * HIDDEN    # 128
LAYERS = 2              # stands in for 12
NUM_PATCHES = (IMG // PATCH) ** 2   # 16
SEQ = NUM_PATCHES + 1               # 17 (+ CLS token)
SEQ_PAD = ((SEQ + 7) // 8) * 8      # 24: 8-sublane aligned per-image slab
EPS = 1e-6                          # Dinov2 layer_norm_eps

CPP = IN_CH * PATCH * PATCH         # 48: flattened patch length
NUM_OUT = 3 + 6 + 1                 # classification(3) | csi(6) | mean(1)
HEAD_PAD = 128                      # lane-dense padding for fused head matmul
CLS_ROWS = 8                        # CLS row + 7 neighbours = one sublane group
VEC_W = 128                         # lane width of packed per-layer vector slab
VEC_ROWS = 16                       # 10 used rows, padded to 16 sublanes

# tanh-GELU runs mostly on the EUP slot; set False for HF-exact erf GELU
# (DINOv2 uses exact GELU; difference is ~1e-3 absolute).
GELU_APPROXIMATE = True


# ---------------- in-kernel helpers --------------------------------------------

def _ln(x, g, b):
    """LayerNorm over the last axis; statistics in f32."""
    mu = jnp.mean(x, axis=-1, keepdims=True)
    var = jnp.mean(jnp.square(x - mu), axis=-1, keepdims=True)
    return (x - mu) * jax.lax.rsqrt(var + EPS) * g + b


def _bf16_dot(x, w_bf16):
    """bf16 x bf16 MXU matmul with f32 accumulation."""
    return jnp.dot(x.astype(jnp.bfloat16), w_bf16,
                   preferred_element_type=jnp.float32)


# ---------------- the single fused kernel --------------------------------------

def dino_kernel(ext_ref, patchw_ref, add_ref, kmask_ref,
                qkvw_ref, ow_ref, f1w_ref, f2w_ref, vec_ref,
                lng_ref, lnb_ref, poolw_ref, poolb_ref, headw_ref, headb_ref,
                out_ref, h_ref):
    layer = pl.program_id(1)            # grid = (image, layer)

    # ---- grid step (b, 0): patch embedding + CLS token + position embeddings --
    @pl.when(layer == 0)
    def _():
        tok = _bf16_dot(ext_ref[0], patchw_ref[...])      # (SEQ_PAD, HIDDEN)
        h_ref[...] = tok + add_ref[...]                   # + (cls|patch-bias)+pos

    # one DMA per layer for all small per-layer vectors: slice rows of the slab
    vec = vec_ref[0]                                       # (VEC_ROWS, 128) f32
    n1_g, n1_b = vec[0:1, :HIDDEN], vec[1:2, :HIDDEN]
    qkv_b      = vec[2:3, :3 * HIDDEN]
    o_b, ls1   = vec[3:4, :HIDDEN], vec[4:5, :HIDDEN]
    n2_g, n2_b = vec[5:6, :HIDDEN], vec[6:7, :HIDDEN]
    fc1_b      = vec[7:8, :MLP_DIM]
    fc2_b, ls2 = vec[8:9, :HIDDEN], vec[9:10, :HIDDEN]

    h = h_ref[...]                       # (SEQ_PAD, HIDDEN) f32 residual stream
    kmask = kmask_ref[...]               # (1, SEQ_PAD): hides pad key columns

    # ---- attention: LN1 -> fused QKV -> per-head attention -> fused out-proj --
    n1 = _ln(h, n1_g, n1_b)
    qkv = (_bf16_dot(n1, qkvw_ref[0]) + qkv_b).astype(jnp.bfloat16)   # (S, 3H)
    scale = 1.0 / (HEAD_DIM ** 0.5)
    o_heads = []
    for hd in range(HEADS):
        lo = hd * HEAD_DIM
        q_h = qkv[:, lo:lo + HEAD_DIM]
        k_h = qkv[:, HIDDEN + lo:HIDDEN + lo + HEAD_DIM]
        v_h = qkv[:, 2 * HIDDEN + lo:2 * HIDDEN + lo + HEAD_DIM]
        # bf16 x bf16 MXU, f32 accumulate; NT dot_general (flash-attn canonical)
        s = jax.lax.dot_general(q_h, k_h, (((1,), (1,)), ((), ())),
                                preferred_element_type=jnp.float32) * scale
        s = s + kmask
        s = s - jnp.max(s, axis=-1, keepdims=True)
        p = jnp.exp(s)
        # approx reciprocal (EUP) — ~1e-3 relative error, fine for inference
        p = p * pl.reciprocal(jnp.sum(p, axis=-1, keepdims=True), approx=True)
        o_heads.append(jnp.dot(p.astype(jnp.bfloat16), v_h,
                               preferred_element_type=jnp.float32))
    # single bf16 output projection over the concatenated heads (1 MXU op, not 4)
    o_cat = jnp.concatenate(o_heads, axis=-1)              # (SEQ_PAD, HIDDEN)
    attn_out = _bf16_dot(o_cat, ow_ref[0]) + o_b
    h = h + ls1 * attn_out                                 # LayerScale + residual

    # ---- MLP block: LN2 -> fc1 -> GELU -> fc2 ----
    n2 = _ln(h, n2_g, n2_b)
    m = jax.nn.gelu(_bf16_dot(n2, f1w_ref[0]) + fc1_b,
                    approximate=GELU_APPROXIMATE)
    m = _bf16_dot(m, f2w_ref[0]) + fc2_b
    h = h + ls2 * m                                        # LayerScale + residual
    h_ref[...] = h

    # ---- last layer: final LN + pooler + fused heads on CLS sublane group only
    @pl.when(layer == LAYERS - 1)
    def _():
        h8 = h[0:CLS_ROWS, :]                              # CLS token is row 0
        hn = _ln(h8, lng_ref[...], lnb_ref[...])
        pooled = jnp.tanh(_bf16_dot(hn, poolw_ref[...]) + poolb_ref[...])
        heads = _bf16_dot(pooled, headw_ref[...]) + headb_ref[...]   # (8, 128)
        col = jax.lax.broadcasted_iota(jnp.int32, heads.shape, 1)
        # ReLU only on csi / mean columns (>= 3); classification left linear
        out_ref[...] = jnp.where(col >= 3, jnp.maximum(heads, 0.0), heads)


# ---------------- BlockSpec helpers ---------------------------------------------

def _resident(shape):
    """Whole-array block resident across the entire (image, layer) grid."""
    zeros = (0,) * len(shape)
    return pl.BlockSpec(shape, lambda b, l, z=zeros: z)


def _per_layer(tail):
    """Per-layer slice of a weight stacked along a leading LAYERS axis."""
    zeros = (0,) * len(tail)
    return pl.BlockSpec((1,) + tuple(tail), lambda b, l, z=zeros: (l,) + z)


def _per_image(tail):
    """Per-image slice of an input stacked along a leading BATCH axis."""
    zeros = (0,) * len(tail)
    return pl.BlockSpec((1,) + tuple(tail), lambda b, l, z=zeros: (b,) + z)


# ---------------- parameter init (deterministic, synthetic) --------------------

def init_params(key):
    # TODO(synk): pretrained microsoft/rad-dino weights + AutoImageProcessor
    # preprocessing are not reproducible in-script; synthetic deterministic init.
    keys = iter(jax.random.split(key, 64))
    nrm = lambda shape: 0.02 * jax.random.normal(next(keys), shape, jnp.float32)

    params = {
        "patch_w": nrm((CPP, HIDDEN)),
        "patch_b": jnp.zeros((HIDDEN,), jnp.float32),
        "cls_token": nrm((1, 1, HIDDEN)),
        "pos_embed": nrm((1, SEQ, HIDDEN)),
        "ln_g": jnp.ones((HIDDEN,), jnp.float32),
        "ln_b": jnp.zeros((HIDDEN,), jnp.float32),
        "pool_w": nrm((HIDDEN, HIDDEN)),
        "pool_b": jnp.zeros((HIDDEN,), jnp.float32),
        "cls_w": nrm((HIDDEN, 3)), "cls_b": jnp.zeros((3,), jnp.float32),
        "csi_w": nrm((HIDDEN, 6)), "csi_b": jnp.zeros((6,), jnp.float32),
        "mean_w": nrm((HIDDEN, 1)), "mean_b": jnp.zeros((1,), jnp.float32),
        "layers": [],
    }
    for _ in range(LAYERS):
        params["layers"].append({
            "n1_g": jnp.ones((HIDDEN,), jnp.float32),
            "n1_b": jnp.zeros((HIDDEN,), jnp.float32),
            "q_w": nrm((HIDDEN, HIDDEN)), "q_b": jnp.zeros((HIDDEN,), jnp.float32),
            "k_w": nrm((HIDDEN, HIDDEN)), "k_b": jnp.zeros((HIDDEN,), jnp.float32),
            "v_w": nrm((HIDDEN, HIDDEN)), "v_b": jnp.zeros((HIDDEN,), jnp.float32),
            "o_w": nrm((HIDDEN, HIDDEN)), "o_b": jnp.zeros((HIDDEN,), jnp.float32),
            "ls1": jnp.ones((HIDDEN,), jnp.float32),
            "n2_g": jnp.ones((HIDDEN,), jnp.float32),
            "n2_b": jnp.zeros((HIDDEN,), jnp.float32),
            "fc1_w": nrm((HIDDEN, MLP_DIM)), "fc1_b": jnp.zeros((MLP_DIM,), jnp.float32),
            "fc2_w": nrm((MLP_DIM, HIDDEN)), "fc2_b": jnp.zeros((HIDDEN,), jnp.float32),
            "ls2": jnp.ones((HIDDEN,), jnp.float32),
        })
    return params


def pack_params(p):
    """One-time repacking: stack/fuse per-layer weights, pack small vectors into
    a single 128-lane slab, fold cls/pos/patch-bias, lane-pad heads, bf16 cast."""
    bf16 = jnp.bfloat16

    def row(v):
        return jnp.pad(v, (0, VEC_W - v.shape[0]))

    vec_layers = []
    for lyr in p["layers"]:
        rows = jnp.stack([
            row(lyr["n1_g"]), row(lyr["n1_b"]),
            row(jnp.concatenate([lyr["q_b"], lyr["k_b"], lyr["v_b"]])),
            row(lyr["o_b"]), row(lyr["ls1"]),
            row(lyr["n2_g"]), row(lyr["n2_b"]),
            row(lyr["fc1_b"]),
            row(lyr["fc2_b"]), row(lyr["ls2"]),
        ])                                                   # (10, 128)
        vec_layers.append(jnp.pad(rows, ((0, VEC_ROWS - rows.shape[0]), (0, 0))))
    vecs = jnp.stack(vec_layers).astype(jnp.float32)         # (L, 16, 128)

    qkv_w = jnp.stack([jnp.concatenate([l["q_w"], l["k_w"], l["v_w"]], axis=1)
                       for l in p["layers"]]).astype(bf16)   # (L, H, 3H)
    o_w = jnp.stack([l["o_w"] for l in p["layers"]]).astype(bf16)
    fc1_w = jnp.stack([l["fc1_w"] for l in p["layers"]]).astype(bf16)
    fc2_w = jnp.stack([l["fc2_w"] for l in p["layers"]]).astype(bf16)

    # fold CLS token, position embeddings and patch-embed bias into one additive
    # per-image slab (parameter-only math, done once); sublane-pad rows are 0.
    pos = p["pos_embed"][0]                                  # (SEQ, H)
    cls_row = p["cls_token"].reshape(1, HIDDEN) + pos[0:1]
    patch_rows = pos[1:] + p["patch_b"][None, :]
    add_slab = jnp.concatenate([cls_row, patch_rows], axis=0)
    add_slab = jnp.pad(add_slab, ((0, SEQ_PAD - SEQ), (0, 0))).astype(jnp.float32)

    # additive mask hiding the sublane-padding key columns (cols >= SEQ)
    col = jnp.arange(SEQ_PAD)
    key_mask = jnp.where(col < SEQ, 0.0, -1e30).astype(jnp.float32)
    key_mask = key_mask.reshape(1, SEQ_PAD)

    # fused + lane-padded task heads: [classification(3) | csi(6) | mean(1)]
    head_w = jnp.concatenate([p["cls_w"], p["csi_w"], p["mean_w"]], axis=1)
    head_w = jnp.pad(head_w, ((0, 0), (0, HEAD_PAD - NUM_OUT))).astype(bf16)
    head_b = jnp.pad(jnp.concatenate([p["cls_b"], p["csi_b"], p["mean_b"]]),
                     (0, HEAD_PAD - NUM_OUT)).reshape(1, HEAD_PAD).astype(jnp.float32)

    return dict(
        patch_w=p["patch_w"].astype(bf16),
        add_slab=add_slab, key_mask=key_mask,
        qkv_w=qkv_w, o_w=o_w, fc1_w=fc1_w, fc2_w=fc2_w, vecs=vecs,
        ln_g=p["ln_g"].reshape(1, HIDDEN), ln_b=p["ln_b"].reshape(1, HIDDEN),
        pool_w=p["pool_w"].astype(bf16), pool_b=p["pool_b"].reshape(1, HIDDEN),
        head_w=head_w, head_b=head_b,
    )


# ---------------- forward pass --------------------------------------------------

def custom_dino_forward(x, pk):
    """x: (B, C, H, W) NCHW f32. Returns (classification, csi_scores, mean_csi)."""
    B, C, H, W = x.shape
    gp = H // PATCH
    # patch extraction (pure layout glue). Row 0 per image is the CLS slot
    # (zeros; CLS/pos/bias folded into add_slab), tail rows are sublane padding.
    patches = (x.reshape(B, C, gp, PATCH, gp, PATCH)
                .transpose(0, 2, 4, 1, 3, 5)
                .reshape(B, NUM_PATCHES, CPP))
    ext = jnp.pad(patches, ((0, 0), (1, SEQ_PAD - SEQ), (0, 0)))  # (B, SEQ_PAD, CPP)

    in_specs = [
        _per_image((SEQ_PAD, CPP)),         # zero-padded per-image patch vectors
        _resident((CPP, HIDDEN)),           # patch_w (bf16)
        _resident((SEQ_PAD, HIDDEN)),       # additive slab: cls/pos/patch-bias
        _resident((1, SEQ_PAD)),            # pad-key attention mask
        _per_layer((HIDDEN, 3 * HIDDEN)),   # fused qkv_w (bf16)
        _per_layer((HIDDEN, HIDDEN)),       # o_w (bf16)
        _per_layer((HIDDEN, MLP_DIM)),      # fc1_w (bf16)
        _per_layer((MLP_DIM, HIDDEN)),      # fc2_w (bf16)
        _per_layer((VEC_ROWS, VEC_W)),      # all per-layer small vectors (1 DMA)
        _resident((1, HIDDEN)),             # final ln_g
        _resident((1, HIDDEN)),             # final ln_b
        _resident((HIDDEN, HIDDEN)),        # pooler dense w (bf16)
        _resident((1, HIDDEN)),             # pooler dense b
        _resident((HIDDEN, HEAD_PAD)),      # fused head_w (bf16, lane-padded)
        _resident((1, HEAD_PAD)),           # fused head_b
    ]

    heads_all = pl.pallas_call(
        dino_kernel,
        grid=(BATCH, LAYERS),               # image axis parallel (2 TCs on v7x)
        out_shape=jax.ShapeDtypeStruct((BATCH * CLS_ROWS, HEAD_PAD), jnp.float32),
        in_specs=in_specs,
        out_specs=pl.BlockSpec((CLS_ROWS, HEAD_PAD), lambda b, l: (b, 0)),
        scratch_shapes=[pltpu.VMEM((SEQ_PAD, HIDDEN), jnp.float32)],
        compiler_params=pltpu.CompilerParams(
            dimension_semantics=("parallel", "arbitrary"),
            # TODO(synk): at real rad-dino sizes (HIDDEN=768, SEQ~1370, L=12)
            # re-budget VMEM and tile fc1/fc2 along K instead of whole-weight
            # residency (v7x physical VMEM is 64 MiB).
            vmem_limit_bytes=32 * 1024 * 1024),
    )(ext, pk["patch_w"], pk["add_slab"], pk["key_mask"],
      pk["qkv_w"], pk["o_w"], pk["fc1_w"], pk["fc2_w"], pk["vecs"],
      pk["ln_g"], pk["ln_b"], pk["pool_w"], pk["pool_b"],
      pk["head_w"], pk["head_b"])

    # output unpacking (pure slicing glue): per image the CLS row is row 0
    cls_rows = heads_all.reshape(BATCH, CLS_ROWS, HEAD_PAD)[:, 0, :]
    classification_output = cls_rows[:, 0:3]
    csi_scores = cls_rows[:, 3:9]        # ReLU already applied in-kernel
    mean_csi = cls_rows[:, 9:10]         # ReLU already applied in-kernel
    return classification_output, csi_scores, mean_csi


# ---------------- main ----------------------------------------------------------

if __name__ == "__main__":
    root = jax.random.PRNGKey(0)
    k_params, k_x = jax.random.split(root)
    params = init_params(k_params)
    packed = pack_params(params)
    x = jax.random.normal(k_x, (BATCH, IN_CH, IMG, IMG), jnp.float32)  # NCHW

    fwd = jax.jit(custom_dino_forward)
    outputs = jax.block_until_ready(fwd(x, packed))

    cls_out, csi_out, mean_out = outputs
    assert cls_out.shape == (BATCH, 3)
    assert csi_out.shape == (BATCH, 6)
    assert mean_out.shape == (BATCH, 1)
    assert bool(jnp.all(jnp.isfinite(cls_out)))
    assert bool(jnp.all(csi_out >= 0)) and bool(jnp.all(mean_out >= 0))
    print("KERNEL_OK")
</pallas_src>

<mosaic_0001>
module attributes {stable_mosaic.version = 11 : i64} {
  func.func @dino_kernel(%arg0: i32, %arg1: i32, %arg2: memref<1x24x48xf32, #tpu.memory_space<vmem>>, %arg3: memref<48x32xbf16, #tpu.memory_space<vmem>>, %arg4: memref<24x32xf32, #tpu.memory_space<vmem>>, %arg5: memref<1x24xf32, #tpu.memory_space<vmem>>, %arg6: memref<1x32x96xbf16, #tpu.memory_space<vmem>>, %arg7: memref<1x32x32xbf16, #tpu.memory_space<vmem>>, %arg8: memref<1x32x128xbf16, #tpu.memory_space<vmem>>, %arg9: memref<1x128x32xbf16, #tpu.memory_space<vmem>>, %arg10: memref<1x16x128xf32, #tpu.memory_space<vmem>>, %arg11: memref<1x32xf32, #tpu.memory_space<vmem>>, %arg12: memref<1x32xf32, #tpu.memory_space<vmem>>, %arg13: memref<32x32xbf16, #tpu.memory_space<vmem>>, %arg14: memref<1x32xf32, #tpu.memory_space<vmem>>, %arg15: memref<32x128xbf16, #tpu.memory_space<vmem>>, %arg16: memref<1x128xf32, #tpu.memory_space<vmem>>, %arg17: memref<8x128xf32, #tpu.memory_space<vmem>>, %arg18: memref<24x32xf32, #tpu.memory_space<vmem>>) attributes {dimension_semantics = [#tpu.dimension_semantics<parallel>, #tpu.dimension_semantics<arbitrary>], iteration_bounds = array<i64: 2, 2>, scalar_prefetch = 0 : i64, scratch_operands = 1 : i64, tpu.core_type = #tpu.core_type<tc>, window_params = [{transform_indices = @transform_0, window_bounds = array<i64: 1, 24, 48>}, {pipeline_mode = #tpu.pipeline_mode<synchronous>, transform_indices = @transform_1, window_bounds = array<i64: 48, 32>}, {pipeline_mode = #tpu.pipeline_mode<synchronous>, transform_indices = @transform_2, window_bounds = array<i64: 24, 32>}, {pipeline_mode = #tpu.pipeline_mode<synchronous>, transform_indices = @transform_3, window_bounds = array<i64: 1, 24>}, {transform_indices = @transform_4, window_bounds = array<i64: 1, 32, 96>}, {transform_indices = @transform_5, window_bounds = array<i64: 1, 32, 32>}, {transform_indices = @transform_6, window_bounds = array<i64: 1, 32, 128>}, {transform_indices = @transform_7, window_bounds = array<i64: 1, 128, 32>}, {transform_indices = @transform_8, window_bounds = array<i64: 1, 16, 128>}, {pipeline_mode = #tpu.pipeline_mode<synchronous>, transform_indices = @transform_9, window_bounds = array<i64: 1, 32>}, {pipeline_mode = #tpu.pipeline_mode<synchronous>, transform_indices = @transform_10, window_bounds = array<i64: 1, 32>}, {pipeline_mode = #tpu.pipeline_mode<synchronous>, transform_indices = @transform_11, window_bounds = array<i64: 32, 32>}, {pipeline_mode = #tpu.pipeline_mode<synchronous>, transform_indices = @transform_12, window_bounds = array<i64: 1, 32>}, {pipeline_mode = #tpu.pipeline_mode<synchronous>, transform_indices = @transform_13, window_bounds = array<i64: 32, 128>}, {pipeline_mode = #tpu.pipeline_mode<synchronous>, transform_indices = @transform_14, window_bounds = array<i64: 1, 128>}, {transform_indices = @transform_15, window_bounds = array<i64: 8, 128>}]} {
    %c0_i32 = arith.constant 0 : i32
    %0 = arith.cmpi eq, %arg1, %c0_i32 : i32
    %1 = arith.extui %0 : i1 to i32
    %c0_i32_0 = arith.constant 0 : i32
    %2 = arith.cmpi ne, %1, %c0_i32_0 : i32
    scf.if %2 {
      %c0_59 = arith.constant 0 : index
      %c0_60 = arith.constant 0 : index
      %c0_61 = arith.constant 0 : index
      %190 = vector.load %arg2[%c0_59, %c0_60, %c0_61] : memref<1x24x48xf32, #tpu.memory_space<vmem>>, vector<1x24x48xf32>
      %191 = vector.shape_cast %190 : vector<1x24x48xf32> to vector<24x48xf32>
      %c0_62 = arith.constant 0 : index
      %c0_63 = arith.constant 0 : index
      %192 = vector.load %arg3[%c0_62, %c0_63] : memref<48x32xbf16, #tpu.memory_space<vmem>>, vector<48x32xbf16>
      %193 = arith.truncf %191 : vector<24x48xf32> to vector<24x48xbf16>
      %cst_64 = arith.constant dense<0.000000e+00> : vector<24x32xf32>
      %194 = tpu.matmul %193, %192, %cst_64 {dimension_numbers = #tpu.dot_dimension_numbers<[1], [0], [0], [1], [0, 0, 1, 1], [], []>} : vector<24x48xbf16>, vector<48x32xbf16>, vector<24x32xf32> -> vector<24x32xf32>
      %c0_65 = arith.constant 0 : index
      %c0_66 = arith.constant 0 : index
      %195 = vector.load %arg4[%c0_65, %c0_66] : memref<24x32xf32, #tpu.memory_space<vmem>>, vector<24x32xf32>
      %196 = arith.addf %194, %195 : vector<24x32xf32>
      %c0_67 = arith.constant 0 : index
      %c0_68 = arith.constant 0 : index
      %197 = vector.load %arg18[%c0_67, %c0_68] : memref<24x32xf32, #tpu.memory_space<vmem>>, vector<24x32xf32>
      tpu.vector_store %arg18[%c0_67, %c0_68], %196 {strides = array<i32>} : memref<24x32xf32, #tpu.memory_space<vmem>>, vector<24x32xf32>,
    } else {
    }
    %c0 = arith.constant 0 : index
    %c0_1 = arith.constant 0 : index
    %c0_2 = arith.constant 0 : index
    %3 = vector.load %arg10[%c0, %c0_1, %c0_2] : memref<1x16x128xf32, #tpu.memory_space<vmem>>, vector<1x16x128xf32>
    %4 = vector.shape_cast %3 : vector<1x16x128xf32> to vector<16x128xf32>
    %5 = vector.extract_strided_slice %4 {offsets = [0, 0], sizes = [1, 32], strides = [1, 1]} : vector<16x128xf32> to vector<1x32xf32>
    %6 = vector.extract_strided_slice %4 {offsets = [1, 0], sizes = [1, 32], strides = [1, 1]} : vector<16x128xf32> to vector<1x32xf32>
    %7 = vector.extract_strided_slice %4 {offsets = [2, 0], sizes = [1, 96], strides = [1, 1]} : vector<16x128xf32> to vector<1x96xf32>
    %8 = vector.extract_strided_slice %4 {offsets = [3, 0], sizes = [1, 32], strides = [1, 1]} : vector<16x128xf32> to vector<1x32xf32>
    %9 = vector.extract_strided_slice %4 {offsets = [4, 0], sizes = [1, 32], strides = [1, 1]} : vector<16x128xf32> to vector<1x32xf32>
    %10 = vector.extract_strided_slice %4 {offsets = [5, 0], sizes = [1, 32], strides = [1, 1]} : vector<16x128xf32> to vector<1x32xf32>
    %11 = vector.extract_strided_slice %4 {offsets = [6, 0], sizes = [1, 32], strides = [1, 1]} : vector<16x128xf32> to vector<1x32xf32>
    %12 = vector.extract_strided_slice %4 {offsets = [7, 0], sizes = [1, 128], strides = [1, 1]} : vector<16x128xf32> to vector<1x128xf32>
    %13 = vector.extract_strided_slice %4 {offsets = [8, 0], sizes = [1, 32], strides = [1, 1]} : vector<16x128xf32> to vector<1x32xf32>
    %14 = vector.extract_strided_slice %4 {offsets = [9, 0], sizes = [1, 32], strides = [1, 1]} : vector<16x128xf32> to vector<1x32xf32>
    %c0_3 = arith.constant 0 : index
    %c0_4 = arith.constant 0 : index
    %15 = vector.load %arg18[%c0_3, %c0_4] : memref<24x32xf32, #tpu.memory_space<vmem>>, vector<24x32xf32>
    %c0_5 = arith.constant 0 : index
    %c0_6 = arith.constant 0 : index
    %16 = vector.load %arg5[%c0_5, %c0_6] : memref<1x24xf32, #tpu.memory_space<vmem>>, vector<1x24xf32>
    %cst = arith.constant dense<0.000000e+00> : vector<24xf32>
    %17 = vector.multi_reduction <add>, %15, %cst [1] : vector<24x32xf32> to vector<24xf32>
    %18 = vector.shape_cast %17 : vector<24xf32> to vector<24x1xf32>
    %cst_7 = arith.constant 3.200000e+01 : f32
    %19 = vector.broadcast %cst_7 : f32 to vector<24x1xf32>
    %20 = arith.divf %18, %19 : vector<24x1xf32>
    %21 = vector.broadcast %20 : vector<24x1xf32> to vector<24x32xf32>
    %22 = arith.subf %15, %21 : vector<24x32xf32>
    %23 = arith.mulf %22, %22 : vector<24x32xf32>
    %cst_8 = arith.constant dense<0.000000e+00> : vector<24xf32>
    %24 = vector.multi_reduction <add>, %23, %cst_8 [1] : vector<24x32xf32> to vector<24xf32>
    %25 = vector.shape_cast %24 : vector<24xf32> to vector<24x1xf32>
    %cst_9 = arith.constant 3.200000e+01 : f32
    %26 = vector.broadcast %cst_9 : f32 to vector<24x1xf32>
    %27 = arith.divf %25, %26 : vector<24x1xf32>
    %28 = vector.broadcast %20 : vector<24x1xf32> to vector<24x32xf32>
    %29 = arith.subf %15, %28 : vector<24x32xf32>
    %cst_10 = arith.constant 9.99999997E-7 : f32
    %30 = vector.broadcast %cst_10 : f32 to vector<24x1xf32>
    %31 = arith.addf %27, %30 : vector<24x1xf32>
    %32 = math.rsqrt %31 : vector<24x1xf32>
    %33 = vector.broadcast %32 : vector<24x1xf32> to vector<24x32xf32>
    %34 = arith.mulf %29, %33 : vector<24x32xf32>
    %35 = vector.broadcast %5 : vector<1x32xf32> to vector<24x32xf32>
    %36 = arith.mulf %34, %35 : vector<24x32xf32>
    %37 = vector.broadcast %6 : vector<1x32xf32> to vector<24x32xf32>
    %38 = arith.addf %36, %37 : vector<24x32xf32>
    %c0_11 = arith.constant 0 : index
    %c0_12 = arith.constant 0 : index
    %c0_13 = arith.constant 0 : index
    %39 = vector.load %arg6[%c0_11, %c0_12, %c0_13] : memref<1x32x96xbf16, #tpu.memory_space<vmem>>, vector<1x32x96xbf16>
    %40 = vector.shape_cast %39 : vector<1x32x96xbf16> to vector<32x96xbf16>
    %41 = arith.truncf %38 : vector<24x32xf32> to vector<24x32xbf16>
    %cst_14 = arith.constant dense<0.000000e+00> : vector<24x96xf32>
    %42 = tpu.matmul %41, %40, %cst_14 {dimension_numbers = #tpu.dot_dimension_numbers<[1], [0], [0], [1], [0, 0, 1, 1], [], []>} : vector<24x32xbf16>, vector<32x96xbf16>, vector<24x96xf32> -> vector<24x96xf32>
    %43 = vector.broadcast %7 : vector<1x96xf32> to vector<24x96xf32>
    %44 = arith.addf %42, %43 : vector<24x96xf32>
    %45 = arith.truncf %44 : vector<24x96xf32> to vector<24x96xbf16>
    %46 = vector.extract_strided_slice %45 {offsets = [0, 0], sizes = [24, 8], strides = [1, 1]} : vector<24x96xbf16> to vector<24x8xbf16>
    %47 = vector.extract_strided_slice %45 {offsets = [0, 32], sizes = [24, 8], strides = [1, 1]} : vector<24x96xbf16> to vector<24x8xbf16>
    %48 = vector.extract_strided_slice %45 {offsets = [0, 64], sizes = [24, 8], strides = [1, 1]} : vector<24x96xbf16> to vector<24x8xbf16>
    %cst_15 = arith.constant dense<0.000000e+00> : vector<24x24xf32>
    %49 = tpu.matmul %46, %47, %cst_15 {dimension_numbers = #tpu.dot_dimension_numbers<[1], [1], [0], [0], [0, 0, 1, 0], [], []>} : vector<24x8xbf16>, vector<24x8xbf16>, vector<24x24xf32> -> vector<24x24xf32>
    %cst_16 = arith.constant 0.353553385 : f32
    %50 = vector.broadcast %cst_16 : f32 to vector<24x24xf32>
    %51 = arith.mulf %49, %50 : vector<24x24xf32>
    %52 = vector.broadcast %16 : vector<1x24xf32> to vector<24x24xf32>
    %53 = arith.addf %51, %52 : vector<24x24xf32>
    %cst_17 = arith.constant dense<0xFF800000> : vector<24xf32>
    %54 = vector.multi_reduction <maximumf>, %53, %cst_17 [1] : vector<24x24xf32> to vector<24xf32>
    %55 = vector.shape_cast %54 : vector<24xf32> to vector<24x1xf32>
    %56 = vector.broadcast %55 : vector<24x1xf32> to vector<24x24xf32>
    %57 = arith.subf %53, %56 : vector<24x24xf32>
    %58 = math.exp %57 : vector<24x24xf32>
    %cst_18 = arith.constant dense<0.000000e+00> : vector<24xf32>
    %59 = vector.multi_reduction <add>, %58, %cst_18 [1] : vector<24x24xf32> to vector<24xf32>
    %60 = vector.shape_cast %59 : vector<24xf32> to vector<24x1xf32>
    %61 = tpu.reciprocal %60 {approx = true} : vector<24x1xf32> -> vector<24x1xf32>
    %62 = vector.broadcast %61 : vector<24x1xf32> to vector<24x24xf32>
    %63 = arith.mulf %58, %62 : vector<24x24xf32>
    %64 = arith.truncf %63 : vector<24x24xf32> to vector<24x24xbf16>
    %cst_19 = arith.constant dense<0.000000e+00> : vector<24x8xf32>
    %65 = tpu.matmul %64, %48, %cst_19 {dimension_numbers = #tpu.dot_dimension_numbers<[1], [0], [0], [1], [0, 0, 1, 1], [], []>} : vector<24x24xbf16>, vector<24x8xbf16>, vector<24x8xf32> -> vector<24x8xf32>
    %66 = vector.extract_strided_slice %45 {offsets = [0, 8], sizes = [24, 8], strides = [1, 1]} : vector<24x96xbf16> to vector<24x8xbf16>
    %67 = vector.extract_strided_slice %45 {offsets = [0, 40], sizes = [24, 8], strides = [1, 1]} : vector<24x96xbf16> to vector<24x8xbf16>
    %68 = vector.extract_strided_slice %45 {offsets = [0, 72], sizes = [24, 8], strides = [1, 1]} : vector<24x96xbf16> to vector<24x8xbf16>
    %cst_20 = arith.constant dense<0.000000e+00> : vector<24x24xf32>
    %69 = tpu.matmul %66, %67, %cst_20 {dimension_numbers = #tpu.dot_dimension_numbers<[1], [1], [0], [0], [0, 0, 1, 0], [], []>} : vector<24x8xbf16>, vector<24x8xbf16>, vector<24x24xf32> -> vector<24x24xf32>
    %cst_21 = arith.constant 0.353553385 : f32
    %70 = vector.broadcast %cst_21 : f32 to vector<24x24xf32>
    %71 = arith.mulf %69, %70 : vector<24x24xf32>
    %72 = vector.broadcast %16 : vector<1x24xf32> to vector<24x24xf32>
    %73 = arith.addf %71, %72 : vector<24x24xf32>
    %cst_22 = arith.constant dense<0xFF800000> : vector<24xf32>
    %74 = vector.multi_reduction <maximumf>, %73, %cst_22 [1] : vector<24x24xf32> to vector<24xf32>
    %75 = vector.shape_cast %74 : vector<24xf32> to vector<24x1xf32>
    %76 = vector.broadcast %75 : vector<24x1xf32> to vector<24x24xf32>
    %77 = arith.subf %73, %76 : vector<24x24xf32>
    %78 = math.exp %77 : vector<24x24xf32>
    %cst_23 = arith.constant dense<0.000000e+00> : vector<24xf32>
    %79 = vector.multi_reduction <add>, %78, %cst_23 [1] : vector<24x24xf32> to vector<24xf32>
    %80 = vector.shape_cast %79 : vector<24xf32> to vector<24x1xf32>
    %81 = tpu.reciprocal %80 {approx = true} : vector<24x1xf32> -> vector<24x1xf32>
    %82 = vector.broadcast %81 : vector<24x1xf32> to vector<24x24xf32>
    %83 = arith.mulf %78, %82 : vector<24x24xf32>
    %84 = arith.truncf %83 : vector<24x24xf32> to vector<24x24xbf16>
    %cst_24 = arith.constant dense<0.000000e+00> : vector<24x8xf32>
    %85 = tpu.matmul %84, %68, %cst_24 {dimension_numbers = #tpu.dot_dimension_numbers<[1], [0], [0], [1], [0, 0, 1, 1], [], []>} : vector<24x24xbf16>, vector<24x8xbf16>, vector<24x8xf32> -> vector<24x8xf32>
    %86 = vector.extract_strided_slice %45 {offsets = [0, 16], sizes = [24, 8], strides = [1, 1]} : vector<24x96xbf16> to vector<24x8xbf16>
    %87 = vector.extract_strided_slice %45 {offsets = [0, 48], sizes = [24, 8], strides = [1, 1]} : vector<24x96xbf16> to vector<24x8xbf16>
    %88 = vector.extract_strided_slice %45 {offsets = [0, 80], sizes = [24, 8], strides = [1, 1]} : vector<24x96xbf16> to vector<24x8xbf16>
    %cst_25 = arith.constant dense<0.000000e+00> : vector<24x24xf32>
    %89 = tpu.matmul %86, %87, %cst_25 {dimension_numbers = #tpu.dot_dimension_numbers<[1], [1], [0], [0], [0, 0, 1, 0], [], []>} : vector<24x8xbf16>, vector<24x8xbf16>, vector<24x24xf32> -> vector<24x24xf32>
    %cst_26 = arith.constant 0.353553385 : f32
    %90 = vector.broadcast %cst_26 : f32 to vector<24x24xf32>
    %91 = arith.mulf %89, %90 : vector<24x24xf32>
    %92 = vector.broadcast %16 : vector<1x24xf32> to vector<24x24xf32>
    %93 = arith.addf %91, %92 : vector<24x24xf32>
    %cst_27 = arith.constant dense<0xFF800000> : vector<24xf32>
    %94 = vector.multi_reduction <maximumf>, %93, %cst_27 [1] : vector<24x24xf32> to vector<24xf32>
    %95 = vector.shape_cast %94 : vector<24xf32> to vector<24x1xf32>
    %96 = vector.broadcast %95 : vector<24x1xf32> to vector<24x24xf32>
    %97 = arith.subf %93, %96 : vector<24x24xf32>
    %98 = math.exp %97 : vector<24x24xf32>
    %cst_28 = arith.constant dense<0.000000e+00> : vector<24xf32>
    %99 = vector.multi_reduction <add>, %98, %cst_28 [1] : vector<24x24xf32> to vector<24xf32>
    %100 = vector.shape_cast %99 : vector<24xf32> to vector<24x1xf32>
    %101 = tpu.reciprocal %100 {approx = true} : vector<24x1xf32> -> vector<24x1xf32>
    %102 = vector.broadcast %101 : vector<24x1xf32> to vector<24x24xf32>
    %103 = arith.mulf %98, %102 : vector<24x24xf32>
    %104 = arith.truncf %103 : vector<24x24xf32> to vector<24x24xbf16>
    %cst_29 = arith.constant dense<0.000000e+00> : vector<24x8xf32>
    %105 = tpu.matmul %104, %88, %cst_29 {dimension_numbers = #tpu.dot_dimension_numbers<[1], [0], [0], [1], [0, 0, 1, 1], [], []>} : vector<24x24xbf16>, vector<24x8xbf16>, vector<24x8xf32> -> vector<24x8xf32>
    %106 = vector.extract_strided_slice %45 {offsets = [0, 24], sizes = [24, 8], strides = [1, 1]} : vector<24x96xbf16> to vector<24x8xbf16>
    %107 = vector.extract_strided_slice %45 {offsets = [0, 56], sizes = [24, 8], strides = [1, 1]} : vector<24x96xbf16> to vector<24x8xbf16>
    %108 = vector.extract_strided_slice %45 {offsets = [0, 88], sizes = [24, 8], strides = [1, 1]} : vector<24x96xbf16> to vector<24x8xbf16>
    %cst_30 = arith.constant dense<0.000000e+00> : vector<24x24xf32>
    %109 = tpu.matmul %106, %107, %cst_30 {dimension_numbers = #tpu.dot_dimension_numbers<[1], [1], [0], [0], [0, 0, 1, 0], [], []>} : vector<24x8xbf16>, vector<24x8xbf16>, vector<24x24xf32> -> vector<24x24xf32>
    %cst_31 = arith.constant 0.353553385 : f32
    %110 = vector.broadcast %cst_31 : f32 to vector<24x24xf32>
    %111 = arith.mulf %109, %110 : vector<24x24xf32>
    %112 = vector.broadcast %16 : vector<1x24xf32> to vector<24x24xf32>
    %113 = arith.addf %111, %112 : vector<24x24xf32>
    %cst_32 = arith.constant dense<0xFF800000> : vector<24xf32>
    %114 = vector.multi_reduction <maximumf>, %113, %cst_32 [1] : vector<24x24xf32> to vector<24xf32>
    %115 = vector.shape_cast %114 : vector<24xf32> to vector<24x1xf32>
    %116 = vector.broadcast %115 : vector<24x1xf32> to vector<24x24xf32>
    %117 = arith.subf %113, %116 : vector<24x24xf32>
    %118 = math.exp %117 : vector<24x24xf32>
    %cst_33 = arith.constant dense<0.000000e+00> : vector<24xf32>
    %119 = vector.multi_reduction <add>, %118, %cst_33 [1] : vector<24x24xf32> to vector<24xf32>
    %120 = vector.shape_cast %119 : vector<24xf32> to vector<24x1xf32>
    %121 = tpu.reciprocal %120 {approx = true} : vector<24x1xf32> -> vector<24x1xf32>
    %122 = vector.broadcast %121 : vector<24x1xf32> to vector<24x24xf32>
    %123 = arith.mulf %118, %122 : vector<24x24xf32>
    %124 = arith.truncf %123 : vector<24x24xf32> to vector<24x24xbf16>
    %cst_34 = arith.constant dense<0.000000e+00> : vector<24x8xf32>
    %125 = tpu.matmul %124, %108, %cst_34 {dimension_numbers = #tpu.dot_dimension_numbers<[1], [0], [0], [1], [0, 0, 1, 1], [], []>} : vector<24x24xbf16>, vector<24x8xbf16>, vector<24x8xf32> -> vector<24x8xf32>
    %126 = tpu.concatenate %65, %85, %105, %125 in 1 : vector<24x8xf32>, vector<24x8xf32>, vector<24x8xf32>, vector<24x8xf32> -> vector<24x32xf32>
    %c0_35 = arith.constant 0 : index
    %c0_36 = arith.constant 0 : index
    %c0_37 = arith.constant 0 : index
    %127 = vector.load %arg7[%c0_35, %c0_36, %c0_37] : memref<1x32x32xbf16, #tpu.memory_space<vmem>>, vector<1x32x32xbf16>
    %128 = vector.shape_cast %127 : vector<1x32x32xbf16> to vector<32x32xbf16>
    %129 = arith.truncf %126 : vector<24x32xf32> to vector<24x32xbf16>
    %cst_38 = arith.constant dense<0.000000e+00> : vector<24x32xf32>
    %130 = tpu.matmul %129, %128, %cst_38 {dimension_numbers = #tpu.dot_dimension_numbers<[1], [0], [0], [1], [0, 0, 1, 1], [], []>} : vector<24x32xbf16>, vector<32x32xbf16>, vector<24x32xf32> -> vector<24x32xf32>
    %131 = vector.broadcast %8 : vector<1x32xf32> to vector<24x32xf32>
    %132 = arith.addf %130, %131 : vector<24x32xf32>
    %133 = vector.broadcast %9 : vector<1x32xf32> to vector<24x32xf32>
    %134 = arith.mulf %133, %132 : vector<24x32xf32>
    %135 = arith.addf %15, %134 : vector<24x32xf32>
    %cst_39 = arith.constant dense<0.000000e+00> : vector<24xf32>
    %136 = vector.multi_reduction <add>, %135, %cst_39 [1] : vector<24x32xf32> to vector<24xf32>
    %137 = vector.shape_cast %136 : vector<24xf32> to vector<24x1xf32>
    %cst_40 = arith.constant 3.200000e+01 : f32
    %138 = vector.broadcast %cst_40 : f32 to vector<24x1xf32>
    %139 = arith.divf %137, %138 : vector<24x1xf32>
    %140 = vector.broadcast %139 : vector<24x1xf32> to vector<24x32xf32>
    %141 = arith.subf %135, %140 : vector<24x32xf32>
    %142 = arith.mulf %141, %141 : vector<24x32xf32>
    %cst_41 = arith.constant dense<0.000000e+00> : vector<24xf32>
    %143 = vector.multi_reduction <add>, %142, %cst_41 [1] : vector<24x32xf32> to vector<24xf32>
    %144 = vector.shape_cast %143 : vector<24xf32> to vector<24x1xf32>
    %cst_42 = arith.constant 3.200000e+01 : f32
    %145 = vector.broadcast %cst_42 : f32 to vector<24x1xf32>
    %146 = arith.divf %144, %145 : vector<24x1xf32>
    %147 = vector.broadcast %139 : vector<24x1xf32> to vector<24x32xf32>
    %148 = arith.subf %135, %147 : vector<24x32xf32>
    %cst_43 = arith.constant 9.99999997E-7 : f32
    %149 = vector.broadcast %cst_43 : f32 to vector<24x1xf32>
    %150 = arith.addf %146, %149 : vector<24x1xf32>
    %151 = math.rsqrt %150 : vector<24x1xf32>
    %152 = vector.broadcast %151 : vector<24x1xf32> to vector<24x32xf32>
    %153 = arith.mulf %148, %152 : vector<24x32xf32>
    %154 = vector.broadcast %10 : vector<1x32xf32> to vector<24x32xf32>
    %155 = arith.mulf %153, %154 : vector<24x32xf32>
    %156 = vector.broadcast %11 : vector<1x32xf32> to vector<24x32xf32>
    %157 = arith.addf %155, %156 : vector<24x32xf32>
    %c0_44 = arith.constant 0 : index
    %c0_45 = arith.constant 0 : index
    %c0_46 = arith.constant 0 : index
    %158 = vector.load %arg8[%c0_44, %c0_45, %c0_46] : memref<1x32x128xbf16, #tpu.memory_space<vmem>>, vector<1x32x128xbf16>
    %159 = vector.shape_cast %158 : vector<1x32x128xbf16> to vector<32x128xbf16>
    %160 = arith.truncf %157 : vector<24x32xf32> to vector<24x32xbf16>
    %cst_47 = arith.constant dense<0.000000e+00> : vector<24x128xf32>
    %161 = tpu.matmul %160, %159, %cst_47 {dimension_numbers = #tpu.dot_dimension_numbers<[1], [0], [0], [1], [0, 0, 1, 1], [], []>} : vector<24x32xbf16>, vector<32x128xbf16>, vector<24x128xf32> -> vector<24x128xf32>
    %162 = vector.broadcast %12 : vector<1x128xf32> to vector<24x128xf32>
    %163 = arith.addf %161, %162 : vector<24x128xf32>
    %164 = arith.mulf %163, %163 : vector<24x128xf32>
    %165 = arith.mulf %163, %164 : vector<24x128xf32>
    %cst_48 = arith.constant 4.471500e-02 : f32
    %166 = vector.broadcast %cst_48 : f32 to vector<24x128xf32>
    %167 = arith.mulf %166, %165 : vector<24x128xf32>
    %168 = arith.addf %163, %167 : vector<24x128xf32>
    %cst_49 = arith.constant 0.797884583 : f32
    %169 = vector.broadcast %cst_49 : f32 to vector<24x128xf32>
    %170 = arith.mulf %169, %168 : vector<24x128xf32>
    %171 = math.tanh %170 : vector<24x128xf32>
    %cst_50 = arith.constant 1.000000e+00 : f32
    %172 = vector.broadcast %cst_50 : f32 to vector<24x128xf32>
    %173 = arith.addf %172, %171 : vector<24x128xf32>
    %cst_51 = arith.constant 5.000000e-01 : f32
    %174 = vector.broadcast %cst_51 : f32 to vector<24x128xf32>
    %175 = arith.mulf %174, %173 : vector<24x128xf32>
    %176 = arith.mulf %163, %175 : vector<24x128xf32>
    %c0_52 = arith.constant 0 : index
    %c0_53 = arith.constant 0 : index
    %c0_54 = arith.constant 0 : index
    %177 = vector.load %arg9[%c0_52, %c0_53, %c0_54] : memref<1x128x32xbf16, #tpu.memory_space<vmem>>, vector<1x128x32xbf16>
    %178 = vector.shape_cast %177 : vector<1x128x32xbf16> to vector<128x32xbf16>
    %179 = arith.truncf %176 : vector<24x128xf32> to vector<24x128xbf16>
    %cst_55 = arith.constant dense<0.000000e+00> : vector<24x32xf32>
    %180 = tpu.matmul %179, %178, %cst_55 {dimension_numbers = #tpu.dot_dimension_numbers<[1], [0], [0], [1], [0, 0, 1, 1], [], []>} : vector<24x128xbf16>, vector<128x32xbf16>, vector<24x32xf32> -> vector<24x32xf32>
    %181 = vector.broadcast %13 : vector<1x32xf32> to vector<24x32xf32>
    %182 = arith.addf %180, %181 : vector<24x32xf32>
    %183 = vector.broadcast %14 : vector<1x32xf32> to vector<24x32xf32>
    %184 = arith.mulf %183, %182 : vector<24x32xf32>
    %185 = arith.addf %135, %184 : vector<24x32xf32>
    %c0_56 = arith.constant 0 : index
    %c0_57 = arith.constant 0 : index
    %186 = vector.load %arg18[%c0_56, %c0_57] : memref<24x32xf32, #tpu.memory_space<vmem>>, vector<24x32xf32>
    tpu.vector_store %arg18[%c0_56, %c0_57], %185 {strides = array<i32>} : memref<24x32xf32, #tpu.memory_space<vmem>>, vector<24x32xf32>,
    %c1_i32 = arith.constant 1 : i32
    %187 = arith.cmpi eq, %arg1, %c1_i32 : i32
    %188 = arith.extui %187 : i1 to i32
    %c0_i32_58 = arith.constant 0 : i32
    %189 = arith.cmpi ne, %188, %c0_i32_58 : i32
    scf.if %189 {
      %190 = vector.extract_strided_slice %185 {offsets = [0, 0], sizes = [8, 32], strides = [1, 1]} : vector<24x32xf32> to vector<8x32xf32>
      %c0_59 = arith.constant 0 : index
      %c0_60 = arith.constant 0 : index
      %191 = vector.load %arg11[%c0_59, %c0_60] : memref<1x32xf32, #tpu.memory_space<vmem>>, vector<1x32xf32>
      %c0_61 = arith.constant 0 : index
      %c0_62 = arith.constant 0 : index
      %192 = vector.load %arg12[%c0_61, %c0_62] : memref<1x32xf32, #tpu.memory_space<vmem>>, vector<1x32xf32>
      %cst_63 = arith.constant dense<0.000000e+00> : vector<8xf32>
      %193 = vector.multi_reduction <add>, %190, %cst_63 [1] : vector<8x32xf32> to vector<8xf32>
      %194 = vector.shape_cast %193 : vector<8xf32> to vector<8x1xf32>
      %cst_64 = arith.constant 3.200000e+01 : f32
      %195 = vector.broadcast %cst_64 : f32 to vector<8x1xf32>
      %196 = arith.divf %194, %195 : vector<8x1xf32>
      %197 = vector.broadcast %196 : vector<8x1xf32> to vector<8x32xf32>
      %198 = arith.subf %190, %197 : vector<8x32xf32>
      %199 = arith.mulf %198, %198 : vector<8x32xf32>
      %cst_65 = arith.constant dense<0.000000e+00> : vector<8xf32>
      %200 = vector.multi_reduction <add>, %199, %cst_65 [1] : vector<8x32xf32> to vector<8xf32>
      %201 = vector.shape_cast %200 : vector<8xf32> to vector<8x1xf32>
      %cst_66 = arith.constant 3.200000e+01 : f32
      %202 = vector.broadcast %cst_66 : f32 to vector<8x1xf32>
      %203 = arith.divf %201, %202 : vector<8x1xf32>
      %204 = vector.broadcast %196 : vector<8x1xf32> to vector<8x32xf32>
      %205 = arith.subf %190, %204 : vector<8x32xf32>
      %cst_67 = arith.constant 9.99999997E-7 : f32
      %206 = vector.broadcast %cst_67 : f32 to vector<8x1xf32>
      %207 = arith.addf %203, %206 : vector<8x1xf32>
      %208 = math.rsqrt %207 : vector<8x1xf32>
      %209 = vector.broadcast %208 : vector<8x1xf32> to vector<8x32xf32>
      %210 = arith.mulf %205, %209 : vector<8x32xf32>
      %211 = vector.broadcast %191 : vector<1x32xf32> to vector<8x32xf32>
      %212 = arith.mulf %210, %211 : vector<8x32xf32>
      %213 = vector.broadcast %192 : vector<1x32xf32> to vector<8x32xf32>
      %214 = arith.addf %212, %213 : vector<8x32xf32>
      %c0_68 = arith.constant 0 : index
      %c0_69 = arith.constant 0 : index
      %215 = vector.load %arg13[%c0_68, %c0_69] : memref<32x32xbf16, #tpu.memory_space<vmem>>, vector<32x32xbf16>
      %216 = arith.truncf %214 : vector<8x32xf32> to vector<8x32xbf16>
      %cst_70 = arith.constant dense<0.000000e+00> : vector<8x32xf32>
      %217 = tpu.matmul %216, %215, %cst_70 {dimension_numbers = #tpu.dot_dimension_numbers<[1], [0], [0], [1], [0, 0, 1, 1], [], []>} : vector<8x32xbf16>, vector<32x32xbf16>, vector<8x32xf32> -> vector<8x32xf32>
      %c0_71 = arith.constant 0 : index
      %c0_72 = arith.constant 0 : index
      %218 = vector.load %arg14[%c0_71, %c0_72] : memref<1x32xf32, #tpu.memory_space<vmem>>, vector<1x32xf32>
      %219 = vector.broadcast %218 : vector<1x32xf32> to vector<8x32xf32>
      %220 = arith.addf %217, %219 : vector<8x32xf32>
      %221 = math.tanh %220 : vector<8x32xf32>
      %c0_73 = arith.constant 0 : index
      %c0_74 = arith.constant 0 : index
      %222 = vector.load %arg15[%c0_73, %c0_74] : memref<32x128xbf16, #tpu.memory_space<vmem>>, vector<32x128xbf16>
      %223 = arith.truncf %221 : vector<8x32xf32> to vector<8x32xbf16>
      %cst_75 = arith.constant dense<0.000000e+00> : vector<8x128xf32>
      %224 = tpu.matmul %223, %222, %cst_75 {dimension_numbers = #tpu.dot_dimension_numbers<[1], [0], [0], [1], [0, 0, 1, 1], [], []>} : vector<8x32xbf16>, vector<32x128xbf16>, vector<8x128xf32> -> vector<8x128xf32>
      %c0_76 = arith.constant 0 : index
      %c0_77 = arith.constant 0 : index
      %225 = vector.load %arg16[%c0_76, %c0_77] : memref<1x128xf32, #tpu.memory_space<vmem>>, vector<1x128xf32>
      %226 = vector.broadcast %225 : vector<1x128xf32> to vector<8x128xf32>
      %227 = arith.addf %224, %226 : vector<8x128xf32>
      %228 = tpu.iota {dimensions = array<i32: 1>} : vector<8x128xi32>
      %c3_i32 = arith.constant 3 : i32
      %229 = vector.broadcast %c3_i32 : i32 to vector<8x128xi32>
      %230 = arith.cmpi sge, %228, %229 : vector<8x128xi32>
      %cst_78 = arith.constant 0.000000e+00 : f32
      %231 = vector.broadcast %cst_78 : f32 to vector<8x128xf32>
      %232 = arith.maximumf %227, %231 : vector<8x128xf32>
      %233 = arith.select %230, %232, %227 : vector<8x128xi1>, vector<8x128xf32>
      %c0_79 = arith.constant 0 : index
      %c0_80 = arith.constant 0 : index
      %234 = vector.load %arg17[%c0_79, %c0_80] : memref<8x128xf32, #tpu.memory_space<vmem>>, vector<8x128xf32>
      tpu.vector_store %arg17[%c0_79, %c0_80], %233 {strides = array<i32>} : memref<8x128xf32, #tpu.memory_space<vmem>>, vector<8x128xf32>,
    } else {
    }
    return
  }
  func.func @transform_0(%arg0: i32, %arg1: i32) -> (i32, i32, i32) {
    %c0_i32 = arith.constant 0 : i32
    %c0_i32_0 = arith.constant 0 : i32
    %c0_i32_1 = arith.constant 0 : i32
    return %arg0, %c0_i32, %c0_i32_0 : i32, i32, i32
  }
  func.func @transform_1(%arg0: i32, %arg1: i32) -> (i32, i32) {
    %c0_i32 = arith.constant 0 : i32
    %c0_i32_0 = arith.constant 0 : i32
    %c0_i32_1 = arith.constant 0 : i32
    return %c0_i32, %c0_i32_0 : i32, i32
  }
  func.func @transform_2(%arg0: i32, %arg1: i32) -> (i32, i32) {
    %c0_i32 = arith.constant 0 : i32
    %c0_i32_0 = arith.constant 0 : i32
    %c0_i32_1 = arith.constant 0 : i32
    return %c0_i32, %c0_i32_0 : i32, i32
  }
  func.func @transform_3(%arg0: i32, %arg1: i32) -> (i32, i32) {
    %c0_i32 = arith.constant 0 : i32
    %c0_i32_0 = arith.constant 0 : i32
    %c0_i32_1 = arith.constant 0 : i32
    return %c0_i32, %c0_i32_0 : i32, i32
  }
  func.func @transform_4(%arg0: i32, %arg1: i32) -> (i32, i32, i32) {
    %c0_i32 = arith.constant 0 : i32
    %c0_i32_0 = arith.constant 0 : i32
    %c0_i32_1 = arith.constant 0 : i32
    return %arg1, %c0_i32, %c0_i32_0 : i32, i32, i32
  }
  func.func @transform_5(%arg0: i32, %arg1: i32) -> (i32, i32, i32) {
    %c0_i32 = arith.constant 0 : i32
    %c0_i32_0 = arith.constant 0 : i32
    %c0_i32_1 = arith.constant 0 : i32
    return %arg1, %c0_i32, %c0_i32_0 : i32, i32, i32
  }
  func.func @transform_6(%arg0: i32, %arg1: i32) -> (i32, i32, i32) {
    %c0_i32 = arith.constant 0 : i32
    %c0_i32_0 = arith.constant 0 : i32
    %c0_i32_1 = arith.constant 0 : i32
    return %arg1, %c0_i32, %c0_i32_0 : i32, i32, i32
  }
  func.func @transform_7(%arg0: i32, %arg1: i32) -> (i32, i32, i32) {
    %c0_i32 = arith.constant 0 : i32
    %c0_i32_0 = arith.constant 0 : i32
    %c0_i32_1 = arith.constant 0 : i32
    return %arg1, %c0_i32, %c0_i32_0 : i32, i32, i32
  }
  func.func @transform_8(%arg0: i32, %arg1: i32) -> (i32, i32, i32) {
    %c0_i32 = arith.constant 0 : i32
    %c0_i32_0 = arith.constant 0 : i32
    %c0_i32_1 = arith.constant 0 : i32
    return %arg1, %c0_i32, %c0_i32_0 : i32, i32, i32
  }
  func.func @transform_9(%arg0: i32, %arg1: i32) -> (i32, i32) {
    %c0_i32 = arith.constant 0 : i32
    %c0_i32_0 = arith.constant 0 : i32
    %c0_i32_1 = arith.constant 0 : i32
    return %c0_i32, %c0_i32_0 : i32, i32
  }
  func.func @transform_10(%arg0: i32, %arg1: i32) -> (i32, i32) {
    %c0_i32 = arith.constant 0 : i32
    %c0_i32_0 = arith.constant 0 : i32
    %c0_i32_1 = arith.constant 0 : i32
    return %c0_i32, %c0_i32_0 : i32, i32
  }
  func.func @transform_11(%arg0: i32, %arg1: i32) -> (i32, i32) {
    %c0_i32 = arith.constant 0 : i32
    %c0_i32_0 = arith.constant 0 : i32
    %c0_i32_1 = arith.constant 0 : i32
    return %c0_i32, %c0_i32_0 : i32, i32
  }
  func.func @transform_12(%arg0: i32, %arg1: i32) -> (i32, i32) {
    %c0_i32 = arith.constant 0 : i32
    %c0_i32_0 = arith.constant 0 : i32
    %c0_i32_1 = arith.constant 0 : i32
    return %c0_i32, %c0_i32_0 : i32, i32
  }
  func.func @transform_13(%arg0: i32, %arg1: i32) -> (i32, i32) {
    %c0_i32 = arith.constant 0 : i32
    %c0_i32_0 = arith.constant 0 : i32
    %c0_i32_1 = arith.constant 0 : i32
    return %c0_i32, %c0_i32_0 : i32, i32
  }
  func.func @transform_14(%arg0: i32, %arg1: i32) -> (i32, i32) {
    %c0_i32 = arith.constant 0 : i32
    %c0_i32_0 = arith.constant 0 : i32
    %c0_i32_1 = arith.constant 0 : i32
    return %c0_i32, %c0_i32_0 : i32, i32
  }
  func.func @transform_15(%arg0: i32, %arg1: i32) -> (i32, i32) {
    %c0_i32 = arith.constant 0 : i32
    %c0_i32_0 = arith.constant 0 : i32
    return %arg0, %c0_i32 : i32, i32
  }
}

</mosaic_0001>

<llo_original>
// kernel: custom_dino_forward.1
$region0: #{custom_dino_forward.1}
  #allocation0 [shape = 'u32[]', space=smem, size = 0x4, offset = 0x4, fixed_abs, tag = 'smem constant byte address 0x4 - core index']
  #allocation1 [shape = 'u32[144,128]{1,0:T(1,128)}', space=vmem, size = 0x12000, scoped, tag = 'internal scratch']
  #allocation2 [shape = 'f32[24,32]{1,0:T(8,128)}', space=vmem, size = 0x3000, scoped, tag = 'scratch operand']
  %s0 = inlined_call_operand.vmem [shape: f32[2,24,48], index: 0, kind: input, shape index: {}]
  %s1 = inlined_call_operand.vmem [shape: bf16[48,32], index: 1, kind: input, shape index: {}]
  %s2 = inlined_call_operand.vmem [shape: f32[24,32], index: 2, kind: input, shape index: {}]
  %s3 = inlined_call_operand.vmem [shape: f32[1,24], index: 3, kind: input, shape index: {}]
  %s4 = inlined_call_operand.vmem [shape: bf16[2,32,96], index: 4, kind: input, shape index: {}]
  %s5 = inlined_call_operand.vmem [shape: bf16[2,32,32], index: 5, kind: input, shape index: {}]
  %s6 = inlined_call_operand.vmem [shape: bf16[2,32,128], index: 6, kind: input, shape index: {}]
  %s7 = inlined_call_operand.vmem [shape: bf16[2,128,32], index: 7, kind: input, shape index: {}]
  %s8 = inlined_call_operand.vmem [shape: f32[2,16,128], index: 8, kind: input, shape index: {}]
  %s9 = inlined_call_operand.vmem [shape: f32[1,32], index: 9, kind: input, shape index: {}]
  %s10 = inlined_call_operand.vmem [shape: f32[1,32], index: 10, kind: input, shape index: {}]
  %s11 = inlined_call_operand.vmem [shape: bf16[32,32], index: 11, kind: input, shape index: {}]
  %s12 = inlined_call_operand.vmem [shape: f32[1,32], index: 12, kind: input, shape index: {}]
  %s13 = inlined_call_operand.vmem [shape: bf16[32,128], index: 13, kind: input, shape index: {}]
  %s14 = inlined_call_operand.vmem [shape: f32[1,128], index: 14, kind: input, shape index: {}]
  %s15 = inlined_call_operand.vmem [shape: f32[16,128], index: 15, kind: output, shape index: {}]
  %s16 = sld [smem:[#allocation0]]
  $region101: #{custom_dino_forward.1} parent=0
    _
  %s18 = ssub.s32 1, %s16
  %s19 = scalar_select 0, %s18, %s16
  loop: start=0, step=1, limit=6
  $region2: #{custom_dino_forward.1} parent=0 // loop_pre_header
    _
  $region3: #{custom_dino_forward.1} parent=0 // loop_header
    %s21 = sphi 0, %s25
    %p22 = scmp.ge.s32.totalorder %s21, 6
    %s28 = sphi 0, %s40
    %s29 = sphi 0, %s36
    %s30 = sphi 0, %s28
    %s31 = sphi 0, %s29
    %s32 = sphi 0, %s30
    %s33 = sphi 0, %s31
    %s43 = sphi 0, %s45
    %s46 = sphi 0, %s43
    %s47 = sphi 0, %s46
    %s63 = sphi 0, %s47
    %s67 = sphi 0, %s67
    %s69 = sphi 0, %s67
    %s70 = sphi 0, %s69
    %s84 = sphi 0, %s70
    %s88 = sphi 0, %s88
    %s90 = sphi 0, %s88
    %s91 = sphi 0, %s90
    %s105 = sphi 0, %s91
    %s109 = sphi 0, %s109
    %s111 = sphi 0, %s109
    %s112 = sphi 0, %s111
    %s126 = sphi 0, %s112
    %s132 = sphi 0, %s134
    %s135 = sphi 0, %s132
    %s136 = sphi 0, %s135
    %s152 = sphi 0, %s136
    %s158 = sphi 0, %s160
    %s161 = sphi 0, %s158
    %s162 = sphi 0, %s161
    %s178 = sphi 0, %s162
    %s184 = sphi 0, %s186
    %s187 = sphi 0, %s184
    %s188 = sphi 0, %s187
    %s204 = sphi 0, %s188
    %s210 = sphi 0, %s212
    %s213 = sphi 0, %s210
    %s214 = sphi 0, %s213
    %s230 = sphi 0, %s214
    %s236 = sphi 0, %s238
    %s239 = sphi 0, %s236
    %s240 = sphi 0, %s239
    %s256 = sphi 0, %s240
    %s260 = sphi 0, %s260
    %s262 = sphi 0, %s260
    %s263 = sphi 0, %s262
    %s277 = sphi 0, %s263
    %s281 = sphi 0, %s281
    %s283 = sphi 0, %s281
    %s284 = sphi 0, %s283
    %s298 = sphi 0, %s284
    %s302 = sphi 0, %s302
    %s304 = sphi 0, %s302
    %s305 = sphi 0, %s304
    %s319 = sphi 0, %s305
    %s323 = sphi 0, %s323
    %s325 = sphi 0, %s323
    %s326 = sphi 0, %s325
    %s340 = sphi 0, %s326
    %s344 = sphi 0, %s344
    %s346 = sphi 0, %s344
    %s347 = sphi 0, %s346
    %s361 = sphi 0, %s347
    %s365 = sphi 0, %s365
    %s367 = sphi 0, %s365
    %s368 = sphi 0, %s367
    %s382 = sphi 0, %s368
    %s388 = sphi 0, %s390
    %s391 = sphi 0, %s388
    %s392 = sphi 0, %s391
    %s408 = sphi 0, %s392
  $region4: #{custom_dino_forward.1} parent=0 // loop_header_branch
    %24 = sbr.rel (%p22) target = $region8
  $region5: #{custom_dino_forward.1} parent=0 // loop_body
    %s26 = ssub.s32 %s21, 1
    %s27 = ssub.s32 %s21, 2
    %s34 = sadd.s32 1, %s29
    %p35 = scmp.ge.s32.totalorder %s34, 2
    %s36 = scalar_select %p35, 0, %s34
    %s37 = sadd.s32 1, %s28
    %s38 = scalar_select %p35, %s37, %s28
    %p39 = scmp.ge.s32.totalorder %s38, 2
    %s40 = scalar_select %p39, 0, %s38
    %s41 = ssub.s32 %s28, %s40
    %p42 = scmp.eq.s32.totalorder %s41, 0
    %s44 = sadd.s32 %s43, 1
    %s45 = scalar_select %p42, %s43, %s44
    %p48 = pneg %p42
    %p49 = scmp.eq.s32.totalorder %s21, 3
    %p50 = por %p48, %p49
    %p51 = scmp.ne.s32.totalorder %s43, %s46
    %p52 = scmp.eq.s32.totalorder %s21, 0
    %p53 = por %p51, %p52
    %p54 = scmp.ne.s32.totalorder %s43, %s46
    %p55 = scmp.eq.s32.totalorder %s26, 3
    %p56 = por %p54, %p55
    %p57 = scmp.ne.s32.totalorder %s46, %s47
    %p58 = scmp.eq.s32.totalorder %s26, 0
    %p59 = por %p57, %p58
    %p60 = scmp.ne.s32.totalorder %s46, %s47
    %p61 = scmp.eq.s32.totalorder %s27, 3
    %p62 = por %p60, %p61
    %p64 = scmp.ne.s32.totalorder %s47, %s63
    %p65 = scmp.eq.s32.totalorder %s27, 0
    %p66 = por %p64, %p65
    %s68 = sadd.s32 %s67, 1
    %p71 = scmp.eq.s32.totalorder %s21, 3
    %p72 = scmp.ne.s32.totalorder %s67, %s69
    %p73 = scmp.eq.s32.totalorder %s21, 0
    %p74 = por %p72, %p73
    %p75 = scmp.ne.s32.totalorder %s67, %s69
    %p76 = scmp.eq.s32.totalorder %s26, 3
    %p77 = por %p75, %p76
    %p78 = scmp.ne.s32.totalorder %s69, %s70
    %p79 = scmp.eq.s32.totalorder %s26, 0
    %p80 = por %p78, %p79
    %p81 = scmp.ne.s32.totalorder %s69, %s70
    %p82 = scmp.eq.s32.totalorder %s27, 3
    %p83 = por %p81, %p82
    %p85 = scmp.ne.s32.totalorder %s70, %s84
    %p86 = scmp.eq.s32.totalorder %s27, 0
    %p87 = por %p85, %p86
    %s89 = sadd.s32 %s88, 1
    %p92 = scmp.eq.s32.totalorder %s21, 3
    %p93 = scmp.ne.s32.totalorder %s88, %s90
    %p94 = scmp.eq.s32.totalorder %s21, 0
    %p95 = por %p93, %p94
    %p96 = scmp.ne.s32.totalorder %s88, %s90
    %p97 = scmp.eq.s32.totalorder %s26, 3
    %p98 = por %p96, %p97
    %p99 = scmp.ne.s32.totalorder %s90, %s91
    %p100 = scmp.eq.s32.totalorder %s26, 0
    %p101 = por %p99, %p100
    %p102 = scmp.ne.s32.totalorder %s90, %s91
    %p103 = scmp.eq.s32.totalorder %s27, 3
    %p104 = por %p102, %p103
    %p106 = scmp.ne.s32.totalorder %s91, %s105
    %p107 = scmp.eq.s32.totalorder %s27, 0
    %p108 = por %p106, %p107
    %s110 = sadd.s32 %s109, 1
    %p113 = scmp.eq.s32.totalorder %s21, 3
    %p114 = scmp.ne.s32.totalorder %s109, %s111
    %p115 = scmp.eq.s32.totalorder %s21, 0
    %p116 = por %p114, %p115
    %p117 = scmp.ne.s32.totalorder %s109, %s111
    %p118 = scmp.eq.s32.totalorder %s26, 3
    %p119 = por %p117, %p118
    %p120 = scmp.ne.s32.totalorder %s111, %s112
    %p121 = scmp.eq.s32.totalorder %s26, 0
    %p122 = por %p120, %p121
    %p123 = scmp.ne.s32.totalorder %s111, %s112
    %p124 = scmp.eq.s32.totalorder %s27, 3
    %p125 = por %p123, %p124
    %p127 = scmp.ne.s32.totalorder %s112, %s126
    %p128 = scmp.eq.s32.totalorder %s27, 0
    %p129 = por %p127, %p128
    %s130 = ssub.s32 %s29, %s36
    %p131 = scmp.eq.s32.totalorder %s130, 0
    %s133 = sadd.s32 %s132, 1
    %s134 = scalar_select %p131, %s132, %s133
    %p137 = pneg %p131
    %p138 = scmp.eq.s32.totalorder %s21, 3
    %p139 = por %p137, %p138
    %p140 = scmp.ne.s32.totalorder %s132, %s135
    %p141 = scmp.eq.s32.totalorder %s21, 0
    %p142 = por %p140, %p141
    %p143 = scmp.ne.s32.totalorder %s132, %s135
    %p144 = scmp.eq.s32.totalorder %s26, 3
    %p145 = por %p143, %p144
    %p146 = scmp.ne.s32.totalorder %s135, %s136
    %p147 = scmp.eq.s32.totalorder %s26, 0
    %p148 = por %p146, %p147
    %p149 = scmp.ne.s32.totalorder %s135, %s136
    %p150 = scmp.eq.s32.totalorder %s27, 3
    %p151 = por %p149, %p150
    %p153 = scmp.ne.s32.totalorder %s136, %s152
    %p154 = scmp.eq.s32.totalorder %s27, 0
    %p155 = por %p153, %p154
    %s156 = ssub.s32 %s29, %s36
    %p157 = scmp.eq.s32.totalorder %s156, 0
    %s159 = sadd.s32 %s158, 1
    %s160 = scalar_select %p157, %s158, %s159
    %p163 = pneg %p157
    %p164 = scmp.eq.s32.totalorder %s21, 3
    %p165 = por %p163, %p164
    %p166 = scmp.ne.s32.totalorder %s158, %s161
    %p167 = scmp.eq.s32.totalorder %s21, 0
    %p168 = por %p166, %p167
    %p169 = scmp.ne.s32.totalorder %s158, %s161
    %p170 = scmp.eq.s32.totalorder %s26, 3
    %p171 = por %p169, %p170
    %p172 = scmp.ne.s32.totalorder %s161, %s162
    %p173 = scmp.eq.s32.totalorder %s26, 0
    %p174 = por %p172, %p173
    %p175 = scmp.ne.s32.totalorder %s161, %s162
    %p176 = scmp.eq.s32.totalorder %s27, 3
    %p177 = por %p175, %p176
    %p179 = scmp.ne.s32.totalorder %s162, %s178
    %p180 = scmp.eq.s32.totalorder %s27, 0
    %p181 = por %p179, %p180
    %s182 = ssub.s32 %s29, %s36
    %p183 = scmp.eq.s32.totalorder %s182, 0
    %s185 = sadd.s32 %s184, 1
    %s186 = scalar_select %p183, %s184, %s185
    %p189 = pneg %p183
    %p190 = scmp.eq.s32.totalorder %s21, 3
    %p191 = por %p189, %p190
    %p192 = scmp.ne.s32.totalorder %s184, %s187
    %p193 = scmp.eq.s32.totalorder %s21, 0
    %p194 = por %p192, %p193
    %p195 = scmp.ne.s32.totalorder %s184, %s187
    %p196 = scmp.eq.s32.totalorder %s26, 3
    %p197 = por %p195, %p196
    %p198 = scmp.ne.s32.totalorder %s187, %s188
    %p199 = scmp.eq.s32.totalorder %s26, 0
    %p200 = por %p198, %p199
    %p201 = scmp.ne.s32.totalorder %s187, %s188
    %p202 = scmp.eq.s32.totalorder %s27, 3
    %p203 = por %p201, %p202
    %p205 = scmp.ne.s32.totalorder %s188, %s204
    %p206 = scmp.eq.s32.totalorder %s27, 0
    %p207 = por %p205, %p206
    %s208 = ssub.s32 %s29, %s36
    %p209 = scmp.eq.s32.totalorder %s208, 0
    %s211 = sadd.s32 %s210, 1
    %s212 = scalar_select %p209, %s210, %s211
    %p215 = pneg %p209
    %p216 = scmp.eq.s32.totalorder %s21, 3
    %p217 = por %p215, %p216
    %p218 = scmp.ne.s32.totalorder %s210, %s213
    %p219 = scmp.eq.s32.totalorder %s21, 0
    %p220 = por %p218, %p219
    %p221 = scmp.ne.s32.totalorder %s210, %s213
    %p222 = scmp.eq.s32.totalorder %s26, 3
    %p223 = por %p221, %p222
    %p224 = scmp.ne.s32.totalorder %s213, %s214
    %p225 = scmp.eq.s32.totalorder %s26, 0
    %p226 = por %p224, %p225
    %p227 = scmp.ne.s32.totalorder %s213, %s214
    %p228 = scmp.eq.s32.totalorder %s27, 3
    %p229 = por %p227, %p228
    %p231 = scmp.ne.s32.totalorder %s214, %s230
    %p232 = scmp.eq.s32.totalorder %s27, 0
    %p233 = por %p231, %p232
    %s234 = ssub.s32 %s29, %s36
    %p235 = scmp.eq.s32.totalorder %s234, 0
    %s237 = sadd.s32 %s236, 1
    %s238 = scalar_select %p235, %s236, %s237
    %p241 = pneg %p235
    %p242 = scmp.eq.s32.totalorder %s21, 3
    %p243 = por %p241, %p242
    %p244 = scmp.ne.s32.totalorder %s236, %s239
    %p245 = scmp.eq.s32.totalorder %s21, 0
    %p246 = por %p244, %p245
    %p247 = scmp.ne.s32.totalorder %s236, %s239
    %p248 = scmp.eq.s32.totalorder %s26, 3
    %p249 = por %p247, %p248
    %p250 = scmp.ne.s32.totalorder %s239, %s240
    %p251 = scmp.eq.s32.totalorder %s26, 0
    %p252 = por %p250, %p251
    %p253 = scmp.ne.s32.totalorder %s239, %s240
    %p254 = scmp.eq.s32.totalorder %s27, 3
    %p255 = por %p253, %p254
    %p257 = scmp.ne.s32.totalorder %s240, %s256
    %p258 = scmp.eq.s32.totalorder %s27, 0
    %p259 = por %p257, %p258
    %s261 = sadd.s32 %s260, 1
    %p264 = scmp.eq.s32.totalorder %s21, 3
    %p265 = scmp.ne.s32.totalorder %s260, %s262
    %p266 = scmp.eq.s32.totalorder %s21, 0
    %p267 = por %p265, %p266
    %p268 = scmp.ne.s32.totalorder %s260, %s262
    %p269 = scmp.eq.s32.totalorder %s26, 3
    %p270 = por %p268, %p269
    %p271 = scmp.ne.s32.totalorder %s262, %s263
    %p272 = scmp.eq.s32.totalorder %s26, 0
    %p273 = por %p271, %p272
    %p274 = scmp.ne.s32.totalorder %s262, %s263
    %p275 = scmp.eq.s32.totalorder %s27, 3
    %p276 = por %p274, %p275
    %p278 = scmp.ne.s32.totalorder %s263, %s277
    %p279 = scmp.eq.s32.totalorder %s27, 0
    %p280 = por %p278, %p279
    %s282 = sadd.s32 %s281, 1
    %p285 = scmp.eq.s32.totalorder %s21, 3
    %p286 = scmp.ne.s32.totalorder %s281, %s283
    %p287 = scmp.eq.s32.totalorder %s21, 0
    %p288 = por %p286, %p287
    %p289 = scmp.ne.s32.totalorder %s281, %s283
    %p290 = scmp.eq.s32.totalorder %s26, 3
    %p291 = por %p289, %p290
    %p292 = scmp.ne.s32.totalorder %s283, %s284
    %p293 = scmp.eq.s32.totalorder %s26, 0
    %p294 = por %p292, %p293
    %p295 = scmp.ne.s32.totalorder %s283, %s284
    %p296 = scmp.eq.s32.totalorder %s27, 3
    %p297 = por %p295, %p296
    %p299 = scmp.ne.s32.totalorder %s284, %s298
    %p300 = scmp.eq.s32.totalorder %s27, 0
    %p301 = por %p299, %p300
    %s303 = sadd.s32 %s302, 1
    %p306 = scmp.eq.s32.totalorder %s21, 3
    %p307 = scmp.ne.s32.totalorder %s302, %s304
    %p308 = scmp.eq.s32.totalorder %s21, 0
    %p309 = por %p307, %p308
    %p310 = scmp.ne.s32.totalorder %s302, %s304
    %p311 = scmp.eq.s32.totalorder %s26, 3
    %p312 = por %p310, %p311
    %p313 = scmp.ne.s32.totalorder %s304, %s305
    %p314 = scmp.eq.s32.totalorder %s26, 0
    %p315 = por %p313, %p314
    %p316 = scmp.ne.s32.totalorder %s304, %s305
    %p317 = scmp.eq.s32.totalorder %s27, 3
    %p318 = por %p316, %p317
    %p320 = scmp.ne.s32.totalorder %s305, %s319
    %p321 = scmp.eq.s32.totalorder %s27, 0
    %p322 = por %p320, %p321
    %s324 = sadd.s32 %s323, 1
    %p327 = scmp.eq.s32.totalorder %s21, 3
    %p328 = scmp.ne.s32.totalorder %s323, %s325
    %p329 = scmp.eq.s32.totalorder %s21, 0
    %p330 = por %p328, %p329
    %p331 = scmp.ne.s32.totalorder %s323, %s325
    %p332 = scmp.eq.s32.totalorder %s26, 3
    %p333 = por %p331, %p332
    %p334 = scmp.ne.s32.totalorder %s325, %s326
    %p335 = scmp.eq.s32.totalorder %s26, 0
    %p336 = por %p334, %p335
    %p337 = scmp.ne.s32.totalorder %s325, %s326
    %p338 = scmp.eq.s32.totalorder %s27, 3
    %p339 = por %p337, %p338
    %p341 = scmp.ne.s32.totalorder %s326, %s340
    %p342 = scmp.eq.s32.totalorder %s27, 0
    %p343 = por %p341, %p342
    %s345 = sadd.s32 %s344, 1
    %p348 = scmp.eq.s32.totalorder %s21, 3
    %p349 = scmp.ne.s32.totalorder %s344, %s346
    %p350 = scmp.eq.s32.totalorder %s21, 0
    %p351 = por %p349, %p350
    %p352 = scmp.ne.s32.totalorder %s344, %s346
    %p353 = scmp.eq.s32.totalorder %s26, 3
    %p354 = por %p352, %p353
    %p355 = scmp.ne.s32.totalorder %s346, %s347
    %p356 = scmp.eq.s32.totalorder %s26, 0
    %p357 = por %p355, %p356
    %p358 = scmp.ne.s32.totalorder %s346, %s347
    %p359 = scmp.eq.s32.totalorder %s27, 3
    %p360 = por %p358, %p359
    %p362 = scmp.ne.s32.totalorder %s347, %s361
    %p363 = scmp.eq.s32.totalorder %s27, 0
    %p364 = por %p362, %p363
    %s366 = sadd.s32 %s365, 1
    %p369 = scmp.eq.s32.totalorder %s21, 3
    %p370 = scmp.ne.s32.totalorder %s365, %s367
    %p371 = scmp.eq.s32.totalorder %s21, 0
    %p372 = por %p370, %p371
    %p373 = scmp.ne.s32.totalorder %s365, %s367
    %p374 = scmp.eq.s32.totalorder %s26, 3
    %p375 = por %p373, %p374
    %p376 = scmp.ne.s32.totalorder %s367, %s368
    %p377 = scmp.eq.s32.totalorder %s26, 0
    %p378 = por %p376, %p377
    %p379 = scmp.ne.s32.totalorder %s367, %s368
    %p380 = scmp.eq.s32.totalorder %s27, 3
    %p381 = por %p379, %p380
    %p383 = scmp.ne.s32.totalorder %s368, %s382
    %p384 = scmp.eq.s32.totalorder %s27, 0
    %p385 = por %p383, %p384
    %s386 = ssub.s32 %s28, %s40
    %p387 = scmp.eq.s32.totalorder %s386, 0
    %s389 = sadd.s32 %s388, 1
    %s390 = scalar_select %p387, %s388, %s389
    %p393 = pneg %p387
    %p394 = scmp.eq.s32.totalorder %s21, 3
    %p395 = por %p393, %p394
    %p396 = scmp.ne.s32.totalorder %s388, %s391
    %p397 = scmp.eq.s32.totalorder %s21, 0
    %p398 = por %p396, %p397
    %p399 = scmp.ne.s32.totalorder %s388, %s391
    %p400 = scmp.eq.s32.totalorder %s26, 3
    %p401 = por %p399, %p400
    %p402 = scmp.ne.s32.totalorder %s391, %s392
    %p403 = scmp.eq.s32.totalorder %s26, 0
    %p404 = por %p402, %p403
    %p405 = scmp.ne.s32.totalorder %s391, %s392
    %p406 = scmp.eq.s32.totalorder %s27, 3
    %p407 = por %p405, %p406
    %p409 = scmp.ne.s32.totalorder %s392, %s408
    %p410 = scmp.eq.s32.totalorder %s27, 0
    %p411 = por %p409, %p410
    %p412 = scmp.le.s32.totalorder 1, %s21
    %p413 = scmp.lt.s32.totalorder %s21, 5
    %p414 = pnand %p412, %p413
    %p415 = pneg %p414
    // Predicated region
    $region9: #{custom_dino_forward.1} parent=5 // pred_check
      _
    $region10: #{custom_dino_forward.1} parent=5 // pred_check_branch
      %417 = sbr.rel (%p414) target = $region12
    $region11: #{custom_dino_forward.1} parent=5 // pred_region
      %s418 = ssub.s32 %s21, 1
      // Predicated region
      $region13: #{custom_dino_forward.1} parent=11 // pred_check
        %p419 = pneg %p80
      $region14: #{custom_dino_forward.1} parent=11 // pred_check_branch
        %421 = sbr.rel (%p419) target = $region16
      $region15: #{custom_dino_forward.1} parent=11 // pred_region
        _
      $region16: #{custom_dino_forward.1} parent=11 // pred_fallthru
        _
      // Predicated region
      $region17: #{custom_dino_forward.1} parent=11 // pred_check
        %p422 = pneg %p101
      $region18: #{custom_dino_forward.1} parent=11 // pred_check_branch
        %424 = sbr.rel (%p422) target = $region20
      $region19: #{custom_dino_forward.1} parent=11 // pred_region
        _
      $region20: #{custom_dino_forward.1} parent=11 // pred_fallthru
        _
      // Predicated region
      $region21: #{custom_dino_forward.1} parent=11 // pred_check
        %p425 = pneg %p122
      $region22: #{custom_dino_forward.1} parent=11 // pred_check_branch
        %427 = sbr.rel (%p425) target = $region24
      $region23: #{custom_dino_forward.1} parent=11 // pred_region
        _
      $region24: #{custom_dino_forward.1} parent=11 // pred_fallthru
        _
      // Predicated region
      $region25: #{custom_dino_forward.1} parent=11 // pred_check
        %p428 = pneg %p273
      $region26: #{custom_dino_forward.1} parent=11 // pred_check_branch
        %430 = sbr.rel (%p428) target = $region28
      $region27: #{custom_dino_forward.1} parent=11 // pred_region
        _
      $region28: #{custom_dino_forward.1} parent=11 // pred_fallthru
        _
      // Predicated region
      $region29: #{custom_dino_forward.1} parent=11 // pred_check
        %p431 = pneg %p294
      $region30: #{custom_dino_forward.1} parent=11 // pred_check_branch
        %433 = sbr.rel (%p431) target = $region32
      $region31: #{custom_dino_forward.1} parent=11 // pred_region
        _
      $region32: #{custom_dino_forward.1} parent=11 // pred_fallthru
        _
      // Predicated region
      $region33: #{custom_dino_forward.1} parent=11 // pred_check
        %p434 = pneg %p315
      $region34: #{custom_dino_forward.1} parent=11 // pred_check_branch
        %436 = sbr.rel (%p434) target = $region36
      $region35: #{custom_dino_forward.1} parent=11 // pred_region
        _
      $region36: #{custom_dino_forward.1} parent=11 // pred_fallthru
        _
      // Predicated region
      $region37: #{custom_dino_forward.1} parent=11 // pred_check
        %p437 = pneg %p336
      $region38: #{custom_dino_forward.1} parent=11 // pred_check_branch
        %439 = sbr.rel (%p437) target = $region40
      $region39: #{custom_dino_forward.1} parent=11 // pred_region
        _
      $region40: #{custom_dino_forward.1} parent=11 // pred_fallthru
        _
      // Predicated region
      $region41: #{custom_dino_forward.1} parent=11 // pred_check
        %p440 = pneg %p357
      $region42: #{custom_dino_forward.1} parent=11 // pred_check_branch
        %442 = sbr.rel (%p440) target = $region44
      $region43: #{custom_dino_forward.1} parent=11 // pred_region
        _
      $region44: #{custom_dino_forward.1} parent=11 // pred_fallthru
        _
      // Predicated region
      $region45: #{custom_dino_forward.1} parent=11 // pred_check
        %p443 = pneg %p378
      $region46: #{custom_dino_forward.1} parent=11 // pred_check_branch
        %445 = sbr.rel (%p443) target = $region48
      $region47: #{custom_dino_forward.1} parent=11 // pred_region
        _
      $region48: #{custom_dino_forward.1} parent=11 // pred_fallthru
        _
    $region12: #{custom_dino_forward.1} parent=5 // pred_fallthru
      _
    %p446 = scmp.lt.s32.totalorder %s21, 4
    // Predicated region
    $region49: #{custom_dino_forward.1} parent=5 // pred_check
      %p447 = pneg %p446
    $region50: #{custom_dino_forward.1} parent=5 // pred_check_branch
      %449 = sbr.rel (%p447) target = $region52
    $region51: #{custom_dino_forward.1} parent=5 // pred_region
      // Predicated region
      $region53: #{custom_dino_forward.1} parent=51 // pred_check
        %p450 = pneg %p53
      $region54: #{custom_dino_forward.1} parent=51 // pred_check_branch
        %452 = sbr.rel (%p450) target = $region56
      $region55: #{custom_dino_forward.1} parent=51 // pred_region
        %p453 = scmp.lt.s32.totalorder %s28, 1
        %s454 = scalar_select %p453, %s28, 1
        %s455 = smul.addr %s454, 3
        %s456 = smul.addr %s455, 8
        %s457 = scalar_lea.vmem %s0, %s456
      $region56: #{custom_dino_forward.1} parent=51 // pred_fallthru
        _
      // Predicated region
      $region57: #{custom_dino_forward.1} parent=51 // pred_check
        %p458 = pneg %p142
      $region58: #{custom_dino_forward.1} parent=51 // pred_check_branch
        %460 = sbr.rel (%p458) target = $region60
      $region59: #{custom_dino_forward.1} parent=51 // pred_region
        %p461 = scmp.lt.s32.totalorder %s29, 1
        %s462 = scalar_select %p461, %s29, 1
        %s463 = smul.addr %s462, 4
        %s464 = smul.addr %s463, 4
        %s465 = scalar_lea.vmem %s4, %s464
      $region60: #{custom_dino_forward.1} parent=51 // pred_fallthru
        _
      // Predicated region
      $region61: #{custom_dino_forward.1} parent=51 // pred_check
        %p466 = pneg %p168
      $region62: #{custom_dino_forward.1} parent=51 // pred_check_branch
        %468 = sbr.rel (%p466) target = $region64
      $region63: #{custom_dino_forward.1} parent=51 // pred_region
        %p469 = scmp.lt.s32.totalorder %s29, 1
        %s470 = scalar_select %p469, %s29, 1
        %s471 = smul.addr %s470, 4
        %s472 = smul.addr %s471, 4
        %s473 = scalar_lea.vmem %s5, %s472
      $region64: #{custom_dino_forward.1} parent=51 // pred_fallthru
        _
      // Predicated region
      $region65: #{custom_dino_forward.1} parent=51 // pred_check
        %p474 = pneg %p194
      $region66: #{custom_dino_forward.1} parent=51 // pred_check_branch
        %476 = sbr.rel (%p474) target = $region68
      $region67: #{custom_dino_forward.1} parent=51 // pred_region
        %p477 = scmp.lt.s32.totalorder %s29, 1
        %s478 = scalar_select %p477, %s29, 1
        %s479 = smul.addr %s478, 4
        %s480 = smul.addr %s479, 4
        %s481 = scalar_lea.vmem %s6, %s480
      $region68: #{custom_dino_forward.1} parent=51 // pred_fallthru
        _
      // Predicated region
      $region69: #{custom_dino_forward.1} parent=51 // pred_check
        %p482 = pneg %p220
      $region70: #{custom_dino_forward.1} parent=51 // pred_check_branch
        %484 = sbr.rel (%p482) target = $region72
      $region71: #{custom_dino_forward.1} parent=51 // pred_region
        %p485 = scmp.lt.s32.totalorder %s29, 1
        %s486 = scalar_select %p485, %s29, 1
        %s487 = smul.addr %s486, 16
        %s488 = smul.addr %s487, 4
        %s489 = scalar_lea.vmem %s7, %s488
      $region72: #{custom_dino_forward.1} parent=51 // pred_fallthru
        _
      // Predicated region
      $region73: #{custom_dino_forward.1} parent=51 // pred_check
        %p490 = pneg %p246
      $region74: #{custom_dino_forward.1} parent=51 // pred_check_branch
        %492 = sbr.rel (%p490) target = $region76
      $region75: #{custom_dino_forward.1} parent=51 // pred_region
        %p493 = scmp.lt.s32.totalorder %s29, 1
        %s494 = scalar_select %p493, %s29, 1
        %s495 = smul.addr %s494, 2
        %s496 = smul.addr %s495, 8
        %s497 = scalar_lea.vmem %s8, %s496
      $region76: #{custom_dino_forward.1} parent=51 // pred_fallthru
        _
    $region52: #{custom_dino_forward.1} parent=5 // pred_fallthru
      _
    %p498 = scmp.le.s32.totalorder 1, %s21
    %p499 = scmp.lt.s32.totalorder %s21, 5
    %p500 = pnand %p498, %p499
    %p501 = pneg %p500
    // Predicated region
    $region77: #{custom_dino_forward.1} parent=5 // pred_check
      _
    $region78: #{custom_dino_forward.1} parent=5 // pred_check_branch
      %503 = sbr.rel (%p500) target = $region80
    $region79: #{custom_dino_forward.1} parent=5 // pred_region
      %s504 = ssub.s32 %s21, 1
      %p505 = scmp.lt.s32.totalorder %s30, 1
      %s506 = scalar_select %p505, %s30, 1
      %s507 = smul.addr %s506, 3
      %s508 = smul.addr %s507, 8
      %s509 = scalar_lea.vmem %s0, %s508
      %p510 = pneg %p59
      %p511 = pneg %p56
      %p512 = pneg %p80
      %p513 = pneg %p77
      %p514 = pneg %p101
      %p515 = pneg %p98
      %p516 = pneg %p122
      %p517 = pneg %p119
      %p518 = scmp.lt.s32.totalorder %s31, 1
      %s519 = scalar_select %p518, %s31, 1
      %s520 = smul.addr %s519, 4
      %s521 = smul.addr %s520, 4
      %s522 = scalar_lea.vmem %s4, %s521
      %p523 = pneg %p148
      %p524 = pneg %p145
      %p525 = scmp.lt.s32.totalorder %s31, 1
      %s526 = scalar_select %p525, %s31, 1
      %s527 = smul.addr %s526, 4
      %s528 = smul.addr %s527, 4
      %s529 = scalar_lea.vmem %s5, %s528
      %p530 = pneg %p174
      %p531 = pneg %p171
      %p532 = scmp.lt.s32.totalorder %s31, 1
      %s533 = scalar_select %p532, %s31, 1
      %s534 = smul.addr %s533, 4
      %s535 = smul.addr %s534, 4
      %s536 = scalar_lea.vmem %s6, %s535
      %p537 = pneg %p200
      %p538 = pneg %p197
      %p539 = scmp.lt.s32.totalorder %s31, 1
      %s540 = scalar_select %p539, %s31, 1
      %s541 = smul.addr %s540, 16
      %s542 = smul.addr %s541, 4
      %s543 = scalar_lea.vmem %s7, %s542
      %p544 = pneg %p226
      %p545 = pneg %p223
      %p546 = scmp.lt.s32.totalorder %s31, 1
      %s547 = scalar_select %p546, %s31, 1
      %s548 = smul.addr %s547, 2
      %s549 = smul.addr %s548, 8
      %s550 = scalar_lea.vmem %s8, %s549
      %p551 = pneg %p252
      %p552 = pneg %p249
      %p553 = pneg %p273
      %p554 = pneg %p270
      %p555 = pneg %p294
      %p556 = pneg %p291
      %p557 = pneg %p315
      %p558 = pneg %p312
      %p559 = pneg %p336
      %p560 = pneg %p333
      %p561 = pneg %p357
      %p562 = pneg %p354
      %p563 = pneg %p378
      %p564 = pneg %p375
      %p565 = pneg %p404
      %p566 = pneg %p401
      %p567 = scmp.lt.s32.totalorder %s30, 1
      %s568 = scalar_select %p567, %s30, 1
      %s569 = smul.addr %s568, 8
      %s570 = scalar_lea.vmem %s15, %s569
      %p571 = scmp.lt.s32.totalorder %s30, 1
      %s572 = scalar_select %p571, %s30, 1
      %s573 = smul.addr %s572, 3
      %s574 = smul.addr %s573, 8
      %s575 = scalar_lea.vmem %s0, %s574
      %p576 = scmp.lt.s32.totalorder %s31, 1
      %s577 = scalar_select %p576, %s31, 1
      %s578 = smul.addr %s577, 4
      %s579 = smul.addr %s578, 4
      %s580 = scalar_lea.vmem %s4, %s579
      %p581 = scmp.lt.s32.totalorder %s31, 1
      %s582 = scalar_select %p581, %s31, 1
      %s583 = smul.addr %s582, 4
      %s584 = smul.addr %s583, 4
      %s585 = scalar_lea.vmem %s5, %s584
      %p586 = scmp.lt.s32.totalorder %s31, 1
      %s587 = scalar_select %p586, %s31, 1
      %s588 = smul.addr %s587, 4
      %s589 = smul.addr %s588, 4
      %s590 = scalar_lea.vmem %s6, %s589
      %p591 = scmp.lt.s32.totalorder %s31, 1
      %s592 = scalar_select %p591, %s31, 1
      %s593 = smul.addr %s592, 16
      %s594 = smul.addr %s593, 4
      %s595 = scalar_lea.vmem %s7, %s594
      %p596 = scmp.lt.s32.totalorder %s31, 1
      %s597 = scalar_select %p596, %s31, 1
      %s598 = smul.addr %s597, 2
      %s599 = smul.addr %s598, 8
      %s600 = scalar_lea.vmem %s8, %s599
      %p601 = scmp.lt.s32.totalorder %s30, 1
      %s602 = scalar_select %p601, %s30, 1
      %s603 = smul.addr %s602, 8
      %s604 = scalar_lea.vmem %s15, %s603
      %p606 = scmp.eq.s32.totalorder %s31, 0
      // Predicated region
      $region81: #{custom_dino_forward.1} parent=79 // pred_check
        %p607 = pneg %p606
      $region82: #{custom_dino_forward.1} parent=79 // pred_check_branch
        %609 = sbr.rel (%p607) target = $region84
      $region83: #{custom_dino_forward.1} parent=79 // pred_region
        %v610 = vld [vmem:[%s575] sm:$0xff]
        %v611 = vld [vmem:[%s575 + $0x8] sm:$0xff]
        %v612 = vld [vmem:[%s575 + $0x10] sm:$0xff]
        %v613 = vld [vmem:[%s1] sm:$0xf]
        %v614 = vld [vmem:[%s1 + $0x4] sm:$0xf]
        %v615 = vld [vmem:[%s1 + $0x8] sm:$0xf]
        %v616 = vld [vmem:[%s1 + $0xc] sm:$0xf]
        %v617 = vld [vmem:[%s1 + $0x10] sm:$0xf]
        %v618 = vld [vmem:[%s1 + $0x14] sm:$0xf]
        %v619 = vpack.c.bf16 %v611, %v610
        %v620 = vpack.c.bf16 %v612, %v612
        %v621 = vld [vmem:[%s2] sm:$0xff]
        %v622 = vld [vmem:[%s2 + $0x8] sm:$0xff]
        %v623 = vld [vmem:[%s2 + $0x10] sm:$0xff]
        %v630 = vunpack.c.l.b16 %v613
        %v631 = vunpack.c.l.b16 %v614
        %v632 = vunpack.c.l.b16 %v615
        %v633 = vunpack.c.l.b16 %v616
        %v634 = vunpack.c.l.b16 %v617
        %v635 = vunpack.c.l.b16 %v618
        %v636 = vpack.c.b16 %v631, %v630
        %v637 = vpack.c.b16 %v633, %v632
        %v638 = vpack.c.b16 %v635, %v634
        %vm642 = vcmask 392192
        %v644 = vsel %vm642, %v619, 0
        %v647 = vsel %vm642, %v620, 0
        %649 = vmatprep.subr.bf16.mxu0 0
        %650 = vmatpush1.bf16.msra.mxu0 %v636
        %651 = vmatprep.subr.bf16.mxu0 0
        %652 = vmatpush1.bf16.msra.mxu0 %v637
        %653 = vmatprep.subr.bf16.mxu0 0
        %654 = vmatpush1.bf16.msra.mxu0 %v638
        %655 = vmatprep.subr.bf16.mxu0 0
        %656 = vmatpush1.bf16.msra.mxu0 0
        %657 = vmatprep.subr.bf16.mxu0 0
        %658 = vmatpush1.bf16.msra.mxu0 0
        %659 = vmatprep.subr.bf16.mxu0 0
        %660 = vmatpush1.bf16.msra.mxu0 0
        %661 = vmatprep.subr.bf16.mxu0 0
        %662 = vmatpush1.bf16.msra.mxu0 0
        %663 = vmatprep.subr.bf16.mxu0 0
        %664 = vmatpush1.bf16.msra.mxu0 0
        %665 = vmatprep.subr.bf16.mxu0 0
        %666 = vmatpush1.bf16.msra.mxu0 0
        %667 = vmatprep.subr.bf16.mxu0 0
        %668 = vmatpush1.bf16.msra.mxu0 0
        %669 = vmatprep.subr.bf16.mxu0 0
        %670 = vmatpush1.bf16.msra.mxu0 0
        %671 = vmatprep.subr.bf16.mxu0 0
        %672 = vmatpush1.bf16.msra.mxu0 0
        %673 = vmatprep.subr.bf16.mxu0 0
        %674 = vmatpush1.bf16.msra.mxu0 0
        %675 = vmatprep.subr.bf16.mxu0 0
        %676 = vmatpush1.bf16.msra.mxu0 0
        %677 = vmatprep.subr.bf16.mxu0 0
        %678 = vmatpush1.bf16.msra.mxu0 0
        %679 = vmatprep.subr.bf16.mxu0 0
        %680 = vmatpush1.bf16.msra.mxu0 0
        %681 = vmatprep.mubr.bf16.mxu0 0
        %682 = vmatmul.mubr.bf16.gmra.mrb[0].mxu0 %v644
        %v683 = vpop.f32.mrb[0].mxu0
        %v684 = vadd.f32 %v621, %v683
        %v685 = vpop.f32.mrb[0].mxu0
        %v686 = vpop.f32.mrb[0].mxu0
        %v687 = vadd.f32 %v622, %v686
        %v688 = vpop.f32.mrb[0].mxu0
        %689 = vmatprep.mubr.bf16.mxu0 0
        %690 = vmatmul.mubr.bf16.gmra.mrb[0].mxu0 %v647
        %v691 = vpop.f32.mrb[0].mxu0
        %v692 = vadd.f32 %v623, %v691
        %v693 = vpop.f32.mrb[0].mxu0
        %v694 = vpop.f32.mrb[0].mxu0
        %v695 = vpop.f32.mrb[0].mxu0
        %696 = vdwg.mxu0
        %vm697 = vcmask 261120
        %698 = vst.msk [vmem:[#allocation2] sm:$0xff] %vm697, %v684
        %699 = vst.msk [vmem:[#allocation2 + $0x8] sm:$0xff] %vm697, %v687
        %700 = vst.msk [vmem:[#allocation2 + $0x10] sm:$0xff] %vm697, %v692
      $region84: #{custom_dino_forward.1} parent=79 // pred_fallthru
        _
      %v701 = vld [vmem:[%s600] sm:$0xff]
      %v702 = vld [vmem:[%s600 + $0x8] sm:$0xff]
      %v703 = vld [vmem:[#allocation2] sm:$0xff]
      %v704 = vld [vmem:[#allocation2 + $0x8] sm:$0xff]
      %v705 = vld [vmem:[#allocation2 + $0x10] sm:$0xff]
      %v706 = vld [vmem:[%s3] sm:$0x1]
      %vm707 = vcmask 261120
      %v708 = vsel %vm707, %v703, 0.0
      %709 = vadd.xlane.f32.xlu0 %v708
      %v710 = vpop.xlane.xlu0 %709
      %v711 = vsel %vm707, %v704, 0.0
      %712 = vadd.xlane.f32.xlu0 %v711
      %v713 = vpop.xlane.xlu0 %712
      %v714 = vsel %vm707, %v705, 0.0
      %715 = vadd.xlane.f32.xlu0 %v714
      %v716 = vpop.xlane.xlu0 %715
      %v717 = vrcp.pop 32.0
      %v718 = vmul.f32 %v710, %v717
      %v719 = vmul.f32 %v713, %v717
      %v720 = vmul.f32 %v716, %v717
      %v721 = vsub.f32 %v703, %v718
      %v722 = vsub.f32 %v704, %v719
      %v723 = vsub.f32 %v705, %v720
      %v724 = vmul.f32 %v721, %v721
      %v725 = vmul.f32 %v722, %v722
      %v726 = vmul.f32 %v723, %v723
      %v727 = vsel %vm707, %v724, 0.0
      %728 = vadd.xlane.f32.xlu0 %v727
      %v729 = vpop.xlane.xlu0 %728
      %v730 = vsel %vm707, %v725, 0.0
      %731 = vadd.xlane.f32.xlu0 %v730
      %v732 = vpop.xlane.xlu0 %731
      %v733 = vsel %vm707, %v726, 0.0
      %734 = vadd.xlane.f32.xlu0 %v733
      %v735 = vpop.xlane.xlu0 %734
      %v736 = vmul.f32 %v729, %v717
      %v737 = vmul.f32 %v732, %v717
      %v738 = vmul.f32 %v735, %v717
      %v739 = vadd.f32 %v736, 1e-06
      %v740 = vadd.f32 %v737, 1e-06
      %v741 = vadd.f32 %v738, 1e-06
      %v742 = vrsqrt.pop %v739
      %v743 = vrsqrt.pop %v740
      %v744 = vrsqrt.pop %v741
      %v745 = vmul.f32 %v721, %v742
      %v746 = vmul.f32 %v722, %v743
      %v747 = vmul.f32 %v723, %v744
      %v748 = vlaneseq
      %v749 = vshrl.u32 %v748, 7
      %v750 = vsub.s32 0, %v749
      %v751 = vrot.slane %v701, %v750
      %v752 = vmul.f32 %v745, %v751
      %v753 = vmul.f32 %v746, %v751
      %v754 = vmul.f32 %v747, %v751
      %v755 = vlaneseq
      %v756 = vshrl.u32 %v755, 7
      %v757 = vsub.s32 1, %v756
      %v758 = vrot.slane %v701, %v757
      %v759 = vadd.f32 %v752, %v758
      %v760 = vadd.f32 %v753, %v758
      %v761 = vadd.f32 %v754, %v758
      %v762 = vld [vmem:[%s580] sm:$0xf]
      %v763 = vld [vmem:[%s580 + $0x4] sm:$0xf]
      %v764 = vld [vmem:[%s580 + $0x8] sm:$0xf]
      %v765 = vld [vmem:[%s580 + $0xc] sm:$0xf]
      %v766 = vpack.c.bf16 %v760, %v759
      %v767 = vpack.c.bf16 %v761, %v761
      %v768 = vlaneseq
      %v769 = vshrl.u32 %v768, 7
      %v770 = vsub.s32 2, %v769
      %v771 = vrot.slane %v701, %v770
      %v776 = vunpack.c.l.b16 %v762
      %v777 = vunpack.c.l.b16 %v763
      %v778 = vunpack.c.l.b16 %v764
      %v779 = vunpack.c.l.b16 %v765
      %v780 = vpack.c.b16 %v777, %v776
      %v781 = vpack.c.b16 %v779, %v778
      %v785 = vsel %vm707, %v766, 0
      %v788 = vsel %vm707, %v767, 0
      %790 = vmatprep.subr.bf16.mxu0 0
      %791 = vmatpush1.bf16.msra.mxu0 %v780
      %792 = vmatprep.subr.bf16.mxu0 0
      %793 = vmatpush1.bf16.msra.mxu0 %v781
      %794 = vmatprep.subr.bf16.mxu0 0
      %795 = vmatpush1.bf16.msra.mxu0 0
      %796 = vmatprep.subr.bf16.mxu0 0
      %797 = vmatpush1.bf16.msra.mxu0 0
      %798 = vmatprep.subr.bf16.mxu0 0
      %799 = vmatpush1.bf16.msra.mxu0 0
      %800 = vmatprep.subr.bf16.mxu0 0
      %801 = vmatpush1.bf16.msra.mxu0 0
      %802 = vmatprep.subr.bf16.mxu0 0
      %803 = vmatpush1.bf16.msra.mxu0 0
      %804 = vmatprep.subr.bf16.mxu0 0
      %805 = vmatpush1.bf16.msra.mxu0 0
      %806 = vmatprep.subr.bf16.mxu0 0
      %807 = vmatpush1.bf16.msra.mxu0 0
      %808 = vmatprep.subr.bf16.mxu0 0
      %809 = vmatpush1.bf16.msra.mxu0 0
      %810 = vmatprep.subr.bf16.mxu0 0
      %811 = vmatpush1.bf16.msra.mxu0 0
      %812 = vmatprep.subr.bf16.mxu0 0
      %813 = vmatpush1.bf16.msra.mxu0 0
      %814 = vmatprep.subr.bf16.mxu0 0
      %815 = vmatpush1.bf16.msra.mxu0 0
      %816 = vmatprep.subr.bf16.mxu0 0
      %817 = vmatpush1.bf16.msra.mxu0 0
      %818 = vmatprep.subr.bf16.mxu0 0
      %819 = vmatpush1.bf16.msra.mxu0 0
      %820 = vmatprep.subr.bf16.mxu0 0
      %821 = vmatpush1.bf16.msra.mxu0 0
      %822 = vmatprep.mubr.bf16.mxu0 0
      %823 = vmatmul.mubr.bf16.gmra.mrb[0].mxu0 %v785
      %v824 = vpop.f32.mrb[0].mxu0
      %v825 = vadd.f32 %v771, %v824
      %v826 = vpop.f32.mrb[0].mxu0
      %v827 = vpop.f32.mrb[0].mxu0
      %v828 = vadd.f32 %v771, %v827
      %v829 = vpop.f32.mrb[0].mxu0
      %830 = vmatprep.mubr.bf16.mxu0 0
      %831 = vmatmul.mubr.bf16.gmra.mrb[0].mxu0 %v788
      %v832 = vpop.f32.mrb[0].mxu0
      %v833 = vadd.f32 %v771, %v832
      %v834 = vpop.f32.mrb[0].mxu0
      %v835 = vpop.f32.mrb[0].mxu0
      %v836 = vpop.f32.mrb[0].mxu0
      %837 = vdwg.mxu0
      %v838 = vpack.c.bf16 %v828, %v825
      %v839 = vpack.c.bf16 %v833, %v833
      %842 = vrot.lane.b32.xlu0 %v838, 96
      %v843 = vpop.permute.xlu0 %842
      %844 = vrot.lane.b32.xlu0 %v839, 96
      %v845 = vpop.permute.xlu0 %844
      %vm846 = vcmask 64512
      %v848 = vsel %vm846, %v838, 0
      %v851 = vsel %vm846, %v839, 0
      %v854 = vsel %vm846, %v843, 0
      %v857 = vsel %vm846, %v845, 0
      %859 = vmatprep.subr.bf16.mxu0 0
      %860 = vmatpush1.bf16.xpose.msra.mxu0 %v854
      %861 = vmatprep.subr.bf16.mxu0 0
      %862 = vmatpush1.bf16.xpose.msra.mxu0 %v857
      %863 = vmatprep.subr.bf16.mxu0 0
      %864 = vmatpush1.bf16.xpose.msra.mxu0 0
      %865 = vmatprep.subr.bf16.mxu0 0
      %866 = vmatpush1.bf16.xpose.msra.mxu0 0
      %867 = vmatprep.subr.bf16.mxu0 0
      %868 = vmatpush1.bf16.xpose.msra.mxu0 0
      %869 = vmatprep.subr.bf16.mxu0 0
      %870 = vmatpush1.bf16.xpose.msra.mxu0 0
      %871 = vmatprep.subr.bf16.mxu0 0
      %872 = vmatpush1.bf16.xpose.msra.mxu0 0
      %873 = vmatprep.subr.bf16.mxu0 0
      %874 = vmatpush1.bf16.xpose.msra.mxu0 0
      %875 = vmatprep.subr.bf16.mxu0 0
      %876 = vmatpush1.bf16.xpose.msra.mxu0 0
      %877 = vmatprep.subr.bf16.mxu0 0
      %878 = vmatpush1.bf16.xpose.msra.mxu0 0
      %879 = vmatprep.subr.bf16.mxu0 0
      %880 = vmatpush1.bf16.xpose.msra.mxu0 0
      %881 = vmatprep.subr.bf16.mxu0 0
      %882 = vmatpush1.bf16.xpose.msra.mxu0 0
      %883 = vmatprep.subr.bf16.mxu0 0
      %884 = vmatpush1.bf16.xpose.msra.mxu0 0
      %885 = vmatprep.subr.bf16.mxu0 0
      %886 = vmatpush1.bf16.xpose.msra.mxu0 0
      %887 = vmatprep.subr.bf16.mxu0 0
      %888 = vmatpush1.bf16.xpose.msra.mxu0 0
      %889 = vmatprep.subr.bf16.mxu0 0
      %890 = vmatpush1.bf16.xpose.msra.mxu0 0
      %891 = vmatprep.mubr.bf16.mxu0 0
      %892 = vmatmul.mubr.bf16.gmra.mrb[0].mxu0 %v848
      %v893 = vpop.f32.mrb[0].mxu0
      %v894 = vadd.f32 0.0, %v893
      %v895 = vpop.f32.mrb[0].mxu0
      %v896 = vpop.f32.mrb[0].mxu0
      %v897 = vadd.f32 0.0, %v896
      %v898 = vpop.f32.mrb[0].mxu0
      %899 = vmatprep.mubr.bf16.mxu0 0
      %900 = vmatmul.mubr.bf16.gmra.mrb[0].mxu0 %v851
      %v901 = vpop.f32.mrb[0].mxu0
      %v902 = vadd.f32 0.0, %v901
      %v903 = vpop.f32.mrb[0].mxu0
      %v904 = vpop.f32.mrb[0].mxu0
      %v905 = vpop.f32.mrb[0].mxu0
      %906 = vdwg.mxu0
      %v907 = vmul.f32 %v894, 0.35355338
      %v908 = vmul.f32 %v897, 0.35355338
      %v909 = vmul.f32 %v902, 0.35355338
      %v911 = vlaneseq
      %v912 = vshrl.u32 %v911, 7
      %v913 = vsub.s32 0, %v912
      %v914 = vrot.slane %v706, %v913
      %v916 = vadd.f32 %v907, %v914
      %v917 = vadd.f32 %v908, %v914
      %v918 = vadd.f32 %v909, %v914
      %vm919 = vcmask 195584
      %v920 = vsel %vm919, %v916, -inf
      %921 = vmax.xlane.f32.xlu0 %v920
      %v922 = vpop.xlane.xlu0 %921
      %v923 = vsel %vm919, %v917, -inf
      %924 = vmax.xlane.f32.xlu0 %v923
      %v925 = vpop.xlane.xlu0 %924
      %v926 = vsel %vm919, %v918, -inf
      %927 = vmax.xlane.f32.xlu0 %v926
      %v928 = vpop.xlane.xlu0 %927
      %v929 = vsub.f32 %v916, %v922
      %v930 = vsub.f32 %v917, %v925
      %v931 = vsub.f32 %v918, %v928
      %v932 = vmul.f32 %v929, 1.442695
      %v933 = vpow.pop %v932
      %v934 = vmul.f32 %v930, 1.442695
      %v935 = vpow.pop %v934
      %v936 = vmul.f32 %v931, 1.442695
      %v937 = vpow.pop %v936
      %v938 = vsel %vm919, %v933, 0.0
      %939 = vadd.xlane.f32.xlu0 %v938
      %v940 = vpop.xlane.xlu0 %939
      %v941 = vsel %vm919, %v935, 0.0
      %942 = vadd.xlane.f32.xlu0 %v941
      %v943 = vpop.xlane.xlu0 %942
      %v944 = vsel %vm919, %v937, 0.0
      %945 = vadd.xlane.f32.xlu0 %v944
      %v946 = vpop.xlane.xlu0 %945
      %v947 = vrcp.pop %v940
      %v948 = vrcp.pop %v943
      %v949 = vrcp.pop %v946
      %v950 = vmul.f32 %v933, %v947
      %v951 = vmul.f32 %v935, %v948
      %v952 = vmul.f32 %v937, %v949
      %v953 = vpack.c.bf16 %v951, %v950
      %v954 = vpack.c.bf16 %v952, %v952
      %955 = vrot.lane.b32.xlu0 %v838, 64
      %v956 = vpop.permute.xlu0 %955
      %957 = vrot.lane.b32.xlu0 %v839, 64
      %v958 = vpop.permute.xlu0 %957
      %v961 = vsel %vm919, %v953, 0
      %v964 = vsel %vm919, %v954, 0
      %vm966 = vcmask 1043456
      %v968 = vsel %vm966, %v958, 0
      %970 = vmatprep.subr.bf16.mxu0 0
      %971 = vmatpush1.bf16.msra.mxu0 %v956
      %972 = vmatprep.subr.bf16.mxu0 0
      %973 = vmatpush1.bf16.msra.mxu0 %v968
      %974 = vmatprep.subr.bf16.mxu0 0
      %975 = vmatpush1.bf16.msra.mxu0 0
      %976 = vmatprep.subr.bf16.mxu0 0
      %977 = vmatpush1.bf16.msra.mxu0 0
      %978 = vmatprep.subr.bf16.mxu0 0
      %979 = vmatpush1.bf16.msra.mxu0 0
      %980 = vmatprep.subr.bf16.mxu0 0
      %981 = vmatpush1.bf16.msra.mxu0 0
      %982 = vmatprep.subr.bf16.mxu0 0
      %983 = vmatpush1.bf16.msra.mxu0 0
      %984 = vmatprep.subr.bf16.mxu0 0
      %985 = vmatpush1.bf16.msra.mxu0 0
      %986 = vmatprep.subr.bf16.mxu0 0
      %987 = vmatpush1.bf16.msra.mxu0 0
      %988 = vmatprep.subr.bf16.mxu0 0
      %989 = vmatpush1.bf16.msra.mxu0 0
      %990 = vmatprep.subr.bf16.mxu0 0
      %991 = vmatpush1.bf16.msra.mxu0 0
      %992 = vmatprep.subr.bf16.mxu0 0
      %993 = vmatpush1.bf16.msra.mxu0 0
      %994 = vmatprep.subr.bf16.mxu0 0
      %995 = vmatpush1.bf16.msra.mxu0 0
      %996 = vmatprep.subr.bf16.mxu0 0
      %997 = vmatpush1.bf16.msra.mxu0 0
      %998 = vmatprep.subr.bf16.mxu0 0
      %999 = vmatpush1.bf16.msra.mxu0 0
      %1000 = vmatprep.subr.bf16.mxu0 0
      %1001 = vmatpush1.bf16.msra.mxu0 0
      %1002 = vmatprep.mubr.bf16.mxu0 0
      %1003 = vmatmul.mubr.bf16.gmra.mrb[0].mxu0 %v961
      %v1004 = vpop.f32.mrb[0].mxu0
      %v1005 = vadd.f32 0.0, %v1004
      %v1006 = vpop.f32.mrb[0].mxu0
      %v1007 = vpop.f32.mrb[0].mxu0
      %v1008 = vadd.f32 0.0, %v1007
      %v1009 = vpop.f32.mrb[0].mxu0
      %1010 = vmatprep.mubr.bf16.mxu0 0
      %1011 = vmatmul.mubr.bf16.gmra.mrb[0].mxu0 %v964
      %v1012 = vpop.f32.mrb[0].mxu0
      %v1013 = vadd.f32 0.0, %v1012
      %v1014 = vpop.f32.mrb[0].mxu0
      %v1015 = vpop.f32.mrb[0].mxu0
      %v1016 = vpop.f32.mrb[0].mxu0
      %1017 = vdwg.mxu0
      %1018 = vrot.lane.b32.xlu0 %v838, 120
      %v1019 = vpop.permute.xlu0 %1018
      %1020 = vrot.lane.b32.xlu0 %v839, 120
      %v1021 = vpop.permute.xlu0 %1020
      %1022 = vrot.lane.b32.xlu0 %v838, 88
      %v1023 = vpop.permute.xlu0 %1022
      %1024 = vrot.lane.b32.xlu0 %v839, 88
      %v1025 = vpop.permute.xlu0 %1024
      %v1027 = vsel %vm846, %v1019, 0
      %v1030 = vsel %vm846, %v1021, 0
      %v1033 = vsel %vm846, %v1023, 0
      %v1036 = vsel %vm846, %v1025, 0
      %1038 = vmatprep.subr.bf16.mxu0 0
      %1039 = vmatpush1.bf16.xpose.msra.mxu0 %v1033
      %1040 = vmatprep.subr.bf16.mxu0 0
      %1041 = vmatpush1.bf16.xpose.msra.mxu0 %v1036
      %1042 = vmatprep.subr.bf16.mxu0 0
      %1043 = vmatpush1.bf16.xpose.msra.mxu0 0
      %1044 = vmatprep.subr.bf16.mxu0 0
      %1045 = vmatpush1.bf16.xpose.msra.mxu0 0
      %1046 = vmatprep.subr.bf16.mxu0 0
      %1047 = vmatpush1.bf16.xpose.msra.mxu0 0
      %1048 = vmatprep.subr.bf16.mxu0 0
      %1049 = vmatpush1.bf16.xpose.msra.mxu0 0
      %1050 = vmatprep.subr.bf16.mxu0 0
      %1051 = vmatpush1.bf16.xpose.msra.mxu0 0
      %1052 = vmatprep.subr.bf16.mxu0 0
      %1053 = vmatpush1.bf16.xpose.msra.mxu0 0
      %1054 = vmatprep.subr.bf16.mxu0 0
      %1055 = vmatpush1.bf16.xpose.msra.mxu0 0
      %1056 = vmatprep.subr.bf16.mxu0 0
      %1057 = vmatpush1.bf16.xpose.msra.mxu0 0
      %1058 = vmatprep.subr.bf16.mxu0 0
      %1059 = vmatpush1.bf16.xpose.msra.mxu0 0
      %1060 = vmatprep.subr.bf16.mxu0 0
      %1061 = vmatpush1.bf16.xpose.msra.mxu0 0
      %1062 = vmatprep.subr.bf16.mxu0 0
      %1063 = vmatpush1.bf16.xpose.msra.mxu0 0
      %1064 = vmatprep.subr.bf16.mxu0 0
      %1065 = vmatpush1.bf16.xpose.msra.mxu0 0
      %1066 = vmatprep.subr.bf16.mxu0 0
      %1067 = vmatpush1.bf16.xpose.msra.mxu0 0
      %1068 = vmatprep.subr.bf16.mxu0 0
      %1069 = vmatpush1.bf16.xpose.msra.mxu0 0
      %1070 = vmatprep.mubr.bf16.mxu0 0
      %1071 = vmatmul.mubr.bf16.gmra.mrb[0].mxu0 %v1027
      %v1072 = vpop.f32.mrb[0].mxu0
      %v1073 = vadd.f32 0.0, %v1072
      %v1074 = vpop.f32.mrb[0].mxu0
      %v1075 = vpop.f32.mrb[0].mxu0
      %v1076 = vadd.f32 0.0, %v1075
      %v1077 = vpop.f32.mrb[0].mxu0
      %1078 = vmatprep.mubr.bf16.mxu0 0
      %1079 = vmatmul.mubr.bf16.gmra.mrb[0].mxu0 %v1030
      %v1080 = vpop.f32.mrb[0].mxu0
      %v1081 = vadd.f32 0.0, %v1080
      %v1082 = vpop.f32.mrb[0].mxu0
      %v1083 = vpop.f32.mrb[0].mxu0
      %v1084 = vpop.f32.mrb[0].mxu0
      %1085 = vdwg.mxu0
      %v1086 = vmul.f32 %v1073, 0.35355338
      %v1087 = vmul.f32 %v1076, 0.35355338
      %v1088 = vmul.f32 %v1081, 0.35355338
      %v1089 = vadd.f32 %v1086, %v914
      %v1090 = vadd.f32 %v1087, %v914
      %v1091 = vadd.f32 %v1088, %v914
      %v1092 = vsel %vm919, %v1089, -inf
      %1093 = vmax.xlane.f32.xlu0 %v1092
      %v1094 = vpop.xlane.xlu0 %1093
      %v1095 = vsel %vm919, %v1090, -inf
      %1096 = vmax.xlane.f32.xlu0 %v1095
      %v1097 = vpop.xlane.xlu0 %1096
      %v1098 = vsel %vm919, %v1091, -inf
      %1099 = vmax.xlane.f32.xlu0 %v1098
      %v1100 = vpop.xlane.xlu0 %1099
      %v1101 = vsub.f32 %v1089, %v1094
      %v1102 = vsub.f32 %v1090, %v1097
      %v1103 = vsub.f32 %v1091, %v1100
      %v1104 = vmul.f32 %v1101, 1.442695
      %v1105 = vpow.pop %v1104
      %v1106 = vmul.f32 %v1102, 1.442695
      %v1107 = vpow.pop %v1106
      %v1108 = vmul.f32 %v1103, 1.442695
      %v1109 = vpow.pop %v1108
      %v1110 = vsel %vm919, %v1105, 0.0
      %1111 = vadd.xlane.f32.xlu0 %v1110
      %v1112 = vpop.xlane.xlu0 %1111
      %v1113 = vsel %vm919, %v1107, 0.0
      %1114 = vadd.xlane.f32.xlu0 %v1113
      %v1115 = vpop.xlane.xlu0 %1114
      %v1116 = vsel %vm919, %v1109, 0.0
      %1117 = vadd.xlane.f32.xlu0 %v1116
      %v1118 = vpop.xlane.xlu0 %1117
      %v1119 = vrcp.pop %v1112
      %v1120 = vrcp.pop %v1115
      %v1121 = vrcp.pop %v1118
      %v1122 = vmul.f32 %v1105, %v1119
      %v1123 = vmul.f32 %v1107, %v1120
      %v1124 = vmul.f32 %v1109, %v1121
      %v1125 = vpack.c.bf16 %v1123, %v1122
      %v1126 = vpack.c.bf16 %v1124, %v1124
      %1127 = vrot.lane.b32.xlu0 %v838, 56
      %v1128 = vpop.permute.xlu0 %1127
      %1129 = vrot.lane.b32.xlu0 %v839, 56
      %v1130 = vpop.permute.xlu0 %1129
      %v1133 = vsel %vm919, %v1125, 0
      %v1136 = vsel %vm919, %v1126, 0
      %v1139 = vsel %vm966, %v1130, 0
      %1141 = vmatprep.subr.bf16.mxu0 0
      %1142 = vmatpush1.bf16.msra.mxu0 %v1128
      %1143 = vmatprep.subr.bf16.mxu0 0
      %1144 = vmatpush1.bf16.msra.mxu0 %v1139
      %1145 = vmatprep.subr.bf16.mxu0 0
      %1146 = vmatpush1.bf16.msra.mxu0 0
      %1147 = vmatprep.subr.bf16.mxu0 0
      %1148 = vmatpush1.bf16.msra.mxu0 0
      %1149 = vmatprep.subr.bf16.mxu0 0
      %1150 = vmatpush1.bf16.msra.mxu0 0
      %1151 = vmatprep.subr.bf16.mxu0 0
      %1152 = vmatpush1.bf16.msra.mxu0 0
      %1153 = vmatprep.subr.bf16.mxu0 0
      %1154 = vmatpush1.bf16.msra.mxu0 0
      %1155 = vmatprep.subr.bf16.mxu0 0
      %1156 = vmatpush1.bf16.msra.mxu0 0
      %1157 = vmatprep.subr.bf16.mxu0 0
      %1158 = vmatpush1.bf16.msra.mxu0 0
      %1159 = vmatprep.subr.bf16.mxu0 0
      %1160 = vmatpush1.bf16.msra.mxu0 0
      %1161 = vmatprep.subr.bf16.mxu0 0
      %1162 = vmatpush1.bf16.msra.mxu0 0
      %1163 = vmatprep.subr.bf16.mxu0 0
      %1164 = vmatpush1.bf16.msra.mxu0 0
      %1165 = vmatprep.subr.bf16.mxu0 0
      %1166 = vmatpush1.bf16.msra.mxu0 0
      %1167 = vmatprep.subr.bf16.mxu0 0
      %1168 = vmatpush1.bf16.msra.mxu0 0
      %1169 = vmatprep.subr.bf16.mxu0 0
      %1170 = vmatpush1.bf16.msra.mxu0 0
      %1171 = vmatprep.subr.bf16.mxu0 0
      %1172 = vmatpush1.bf16.msra.mxu0 0
      %1173 = vmatprep.mubr.bf16.mxu0 0
      %1174 = vmatmul.mubr.bf16.gmra.mrb[0].mxu0 %v1133
      %v1175 = vpop.f32.mrb[0].mxu0
      %v1176 = vadd.f32 0.0, %v1175
      %v1177 = vpop.f32.mrb[0].mxu0
      %v1178 = vpop.f32.mrb[0].mxu0
      %v1179 = vadd.f32 0.0, %v1178
      %v1180 = vpop.f32.mrb[0].mxu0
      %1181 = vmatprep.mubr.bf16.mxu0 0
      %1182 = vmatmul.mubr.bf16.gmra.mrb[0].mxu0 %v1136
      %v1183 = vpop.f32.mrb[0].mxu0
      %v1184 = vadd.f32 0.0, %v1183
      %v1185 = vpop.f32.mrb[0].mxu0
      %v1186 = vpop.f32.mrb[0].mxu0
      %v1187 = vpop.f32.mrb[0].mxu0
      %1188 = vdwg.mxu0
      %1189 = vrot.lane.b32.xlu0 %v838, 112
      %v1190 = vpop.permute.xlu0 %1189
      %1191 = vrot.lane.b32.xlu0 %v839, 112
      %v1192 = vpop.permute.xlu0 %1191
      %1193 = vrot.lane.b32.xlu0 %v838, 80
      %v1194 = vpop.permute.xlu0 %1193
      %1195 = vrot.lane.b32.xlu0 %v839, 80
      %v1196 = vpop.permute.xlu0 %1195
      %v1198 = vsel %vm846, %v1190, 0
      %v1201 = vsel %vm846, %v1192, 0
      %v1204 = vsel %vm846, %v1194, 0
      %v1207 = vsel %vm846, %v1196, 0
      %1209 = vmatprep.subr.bf16.mxu0 0
      %1210 = vmatpush1.bf16.xpose.msra.mxu0 %v1204
      %1211 = vmatprep.subr.bf16.mxu0 0
      %1212 = vmatpush1.bf16.xpose.msra.mxu0 %v1207
      %1213 = vmatprep.subr.bf16.mxu0 0
      %1214 = vmatpush1.bf16.xpose.msra.mxu0 0
      %1215 = vmatprep.subr.bf16.mxu0 0
      %1216 = vmatpush1.bf16.xpose.msra.mxu0 0
      %1217 = vmatprep.subr.bf16.mxu0 0
      %1218 = vmatpush1.bf16.xpose.msra.mxu0 0
      %1219 = vmatprep.subr.bf16.mxu0 0
      %1220 = vmatpush1.bf16.xpose.msra.mxu0 0
      %1221 = vmatprep.subr.bf16.mxu0 0
      %1222 = vmatpush1.bf16.xpose.msra.mxu0 0
      %1223 = vmatprep.subr.bf16.mxu0 0
      %1224 = vmatpush1.bf16.xpose.msra.mxu0 0
      %1225 = vmatprep.subr.bf16.mxu0 0
      %1226 = vmatpush1.bf16.xpose.msra.mxu0 0
      %1227 = vmatprep.subr.bf16.mxu0 0
      %1228 = vmatpush1.bf16.xpose.msra.mxu0 0
      %1229 = vmatprep.subr.bf16.mxu0 0
      %1230 = vmatpush1.bf16.xpose.msra.mxu0 0
      %1231 = vmatprep.subr.bf16.mxu0 0
      %1232 = vmatpush1.bf16.xpose.msra.mxu0 0
      %1233 = vmatprep.subr.bf16.mxu0 0
      %1234 = vmatpush1.bf16.xpose.msra.mxu0 0
      %1235 = vmatprep.subr.bf16.mxu0 0
      %1236 = vmatpush1.bf16.xpose.msra.mxu0 0
      %1237 = vmatprep.subr.bf16.mxu0 0
      %1238 = vmatpush1.bf16.xpose.msra.mxu0 0
      %1239 = vmatprep.subr.bf16.mxu0 0
      %1240 = vmatpush1.bf16.xpose.msra.mxu0 0
      %1241 = vmatprep.mubr.bf16.mxu0 0
      %1242 = vmatmul.mubr.bf16.gmra.mrb[0].mxu0 %v1198
      %v1243 = vpop.f32.mrb[0].mxu0
      %v1244 = vadd.f32 0.0, %v1243
      %v1245 = vpop.f32.mrb[0].mxu0
      %v1246 = vpop.f32.mrb[0].mxu0
      %v1247 = vadd.f32 0.0, %v1246
      %v1248 = vpop.f32.mrb[0].mxu0
      %1249 = vmatprep.mubr.bf16.mxu0 0
      %1250 = vmatmul.mubr.bf16.gmra.mrb[0].mxu0 %v1201
      %v1251 = vpop.f32.mrb[0].mxu0
      %v1252 = vadd.f32 0.0, %v1251
      %v1253 = vpop.f32.mrb[0].mxu0
      %v1254 = vpop.f32.mrb[0].mxu0
      %v1255 = vpop.f32.mrb[0].mxu0
      %1256 = vdwg.mxu0
      %v1257 = vmul.f32 %v1244, 0.35355338
      %v1258 = vmul.f32 %v1247, 0.35355338
      %v1259 = vmul.f32 %v1252, 0.35355338
      %v1260 = vadd.f32 %v1257, %v914
      %v1261 = vadd.f32 %v1258, %v914
      %v1262 = vadd.f32 %v1259, %v914
      %v1263 = vsel %vm919, %v1260, -inf
      %1264 = vmax.xlane.f32.xlu0 %v1263
      %v1265 = vpop.xlane.xlu0 %1264
      %v1266 = vsel %vm919, %v1261, -inf
      %1267 = vmax.xlane.f32.xlu0 %v1266
      %v1268 = vpop.xlane.xlu0 %1267
      %v1269 = vsel %vm919, %v1262, -inf
      %1270 = vmax.xlane.f32.xlu0 %v1269
      %v1271 = vpop.xlane.xlu0 %1270
      %v1272 = vsub.f32 %v1260, %v1265
      %v1273 = vsub.f32 %v1261, %v1268
      %v1274 = vsub.f32 %v1262, %v1271
      %v1275 = vmul.f32 %v1272, 1.442695
      %v1276 = vpow.pop %v1275
      %v1277 = vmul.f32 %v1273, 1.442695
      %v1278 = vpow.pop %v1277
      %v1279 = vmul.f32 %v1274, 1.442695
      %v1280 = vpow.pop %v1279
      %v1281 = vsel %vm919, %v1276, 0.0
      %1282 = vadd.xlane.f32.xlu0 %v1281
      %v1283 = vpop.xlane.xlu0 %1282
      %v1284 = vsel %vm919, %v1278, 0.0
      %1285 = vadd.xlane.f32.xlu0 %v1284
      %v1286 = vpop.xlane.xlu0 %1285
      %v1287 = vsel %vm919, %v1280, 0.0
      %1288 = vadd.xlane.f32.xlu0 %v1287
      %v1289 = vpop.xlane.xlu0 %1288
      %v1290 = vrcp.pop %v1283
      %v1291 = vrcp.pop %v1286
      %v1292 = vrcp.pop %v1289
      %v1293 = vmul.f32 %v1276, %v1290
      %v1294 = vmul.f32 %v1278, %v1291
      %v1295 = vmul.f32 %v1280, %v1292
      %v1296 = vpack.c.bf16 %v1294, %v1293
      %v1297 = vpack.c.bf16 %v1295, %v1295
      %1298 = vrot.lane.b32.xlu0 %v838, 48
      %v1299 = vpop.permute.xlu0 %1298
      %1300 = vrot.lane.b32.xlu0 %v839, 48
      %v1301 = vpop.permute.xlu0 %1300
      %v1304 = vsel %vm919, %v1296, 0
      %v1307 = vsel %vm919, %v1297, 0
      %v1310 = vsel %vm966, %v1301, 0
      %1312 = vmatprep.subr.bf16.mxu0 0
      %1313 = vmatpush1.bf16.msra.mxu0 %v1299
      %1314 = vmatprep.subr.bf16.mxu0 0
      %1315 = vmatpush1.bf16.msra.mxu0 %v1310
      %1316 = vmatprep.subr.bf16.mxu0 0
      %1317 = vmatpush1.bf16.msra.mxu0 0
      %1318 = vmatprep.subr.bf16.mxu0 0
      %1319 = vmatpush1.bf16.msra.mxu0 0
      %1320 = vmatprep.subr.bf16.mxu0 0
      %1321 = vmatpush1.bf16.msra.mxu0 0
      %1322 = vmatprep.subr.bf16.mxu0 0
      %1323 = vmatpush1.bf16.msra.mxu0 0
      %1324 = vmatprep.subr.bf16.mxu0 0
      %1325 = vmatpush1.bf16.msra.mxu0 0
      %1326 = vmatprep.subr.bf16.mxu0 0
      %1327 = vmatpush1.bf16.msra.mxu0 0
      %1328 = vmatprep.subr.bf16.mxu0 0
      %1329 = vmatpush1.bf16.msra.mxu0 0
      %1330 = vmatprep.subr.bf16.mxu0 0
      %1331 = vmatpush1.bf16.msra.mxu0 0
      %1332 = vmatprep.subr.bf16.mxu0 0
      %1333 = vmatpush1.bf16.msra.mxu0 0
      %1334 = vmatprep.subr.bf16.mxu0 0
      %1335 = vmatpush1.bf16.msra.mxu0 0
      %1336 = vmatprep.subr.bf16.mxu0 0
      %1337 = vmatpush1.bf16.msra.mxu0 0
      %1338 = vmatprep.subr.bf16.mxu0 0
      %1339 = vmatpush1.bf16.msra.mxu0 0
      %1340 = vmatprep.subr.bf16.mxu0 0
      %1341 = vmatpush1.bf16.msra.mxu0 0
      %1342 = vmatprep.subr.bf16.mxu0 0
      %1343 = vmatpush1.bf16.msra.mxu0 0
      %1344 = vmatprep.mubr.bf16.mxu0 0
      %1345 = vmatmul.mubr.bf16.gmra.mrb[0].mxu0 %v1304
      %v1346 = vpop.f32.mrb[0].mxu0
      %v1347 = vadd.f32 0.0, %v1346
      %v1348 = vpop.f32.mrb[0].mxu0
      %v1349 = vpop.f32.mrb[0].mxu0
      %v1350 = vadd.f32 0.0, %v1349
      %v1351 = vpop.f32.mrb[0].mxu0
      %1352 = vmatprep.mubr.bf16.mxu0 0
      %1353 = vmatmul.mubr.bf16.gmra.mrb[0].mxu0 %v1307
      %v1354 = vpop.f32.mrb[0].mxu0
      %v1355 = vadd.f32 0.0, %v1354
      %v1356 = vpop.f32.mrb[0].mxu0
      %v1357 = vpop.f32.mrb[0].mxu0
      %v1358 = vpop.f32.mrb[0].mxu0
      %1359 = vdwg.mxu0
      %1360 = vrot.lane.b32.xlu0 %v838, 104
      %v1361 = vpop.permute.xlu0 %1360
      %1362 = vrot.lane.b32.xlu0 %v839, 104
      %v1363 = vpop.permute.xlu0 %1362
      %1364 = vrot.lane.b32.xlu0 %v838, 72
      %v1365 = vpop.permute.xlu0 %1364
      %1366 = vrot.lane.b32.xlu0 %v839, 72
      %v1367 = vpop.permute.xlu0 %1366
      %v1369 = vsel %vm846, %v1361, 0
      %v1372 = vsel %vm846, %v1363, 0
      %v1375 = vsel %vm846, %v1365, 0
      %v1378 = vsel %vm846, %v1367, 0
      %1380 = vmatprep.subr.bf16.mxu0 0
      %1381 = vmatpush1.bf16.xpose.msra.mxu0 %v1375
      %1382 = vmatprep.subr.bf16.mxu0 0
      %1383 = vmatpush1.bf16.xpose.msra.mxu0 %v1378
      %1384 = vmatprep.subr.bf16.mxu0 0
      %1385 = vmatpush1.bf16.xpose.msra.mxu0 0
      %1386 = vmatprep.subr.bf16.mxu0 0
      %1387 = vmatpush1.bf16.xpose.msra.mxu0 0
      %1388 = vmatprep.subr.bf16.mxu0 0
      %1389 = vmatpush1.bf16.xpose.msra.mxu0 0
      %1390 = vmatprep.subr.bf16.mxu0 0
      %1391 = vmatpush1.bf16.xpose.msra.mxu0 0
      %1392 = vmatprep.subr.bf16.mxu0 0
      %1393 = vmatpush1.bf16.xpose.msra.mxu0 0
      %1394 = vmatprep.subr.bf16.mxu0 0
      %1395 = vmatpush1.bf16.xpose.msra.mxu0 0
      %1396 = vmatprep.subr.bf16.mxu0 0
      %1397 = vmatpush1.bf16.xpose.msra.mxu0 0
      %1398 = vmatprep.subr.bf16.mxu0 0
      %1399 = vmatpush1.bf16.xpose.msra.mxu0 0
      %1400 = vmatprep.subr.bf16.mxu0 0
      %1401 = vmatpush1.bf16.xpose.msra.mxu0 0
      %1402 = vmatprep.subr.bf16.mxu0 0
      %1403 = vmatpush1.bf16.xpose.msra.mxu0 0
      %1404 = vmatprep.subr.bf16.mxu0 0
      %1405 = vmatpush1.bf16.xpose.msra.mxu0 0
      %1406 = vmatprep.subr.bf16.mxu0 0
      %1407 = vmatpush1.bf16.xpose.msra.mxu0 0
      %1408 = vmatprep.subr.bf16.mxu0 0
      %1409 = vmatpush1.bf16.xpose.msra.mxu0 0
      %1410 = vmatprep.subr.bf16.mxu0 0
      %1411 = vmatpush1.bf16.xpose.msra.mxu0 0
      %1412 = vmatprep.mubr.bf16.mxu0 0
      %1413 = vmatmul.mubr.bf16.gmra.mrb[0].mxu0 %v1369
      %v1414 = vpop.f32.mrb[0].mxu0
      %v1415 = vadd.f32 0.0, %v1414
      %v1416 = vpop.f32.mrb[0].mxu0
      %v1417 = vpop.f32.mrb[0].mxu0
      %v1418 = vadd.f32 0.0, %v1417
      %v1419 = vpop.f32.mrb[0].mxu0
      %1420 = vmatprep.mubr.bf16.mxu0 0
      %1421 = vmatmul.mubr.bf16.gmra.mrb[0].mxu0 %v1372
      %v1422 = vpop.f32.mrb[0].mxu0
      %v1423 = vadd.f32 0.0, %v1422
      %v1424 = vpop.f32.mrb[0].mxu0
      %v1425 = vpop.f32.mrb[0].mxu0
      %v1426 = vpop.f32.mrb[0].mxu0
      %1427 = vdwg.mxu0
      %v1428 = vmul.f32 %v1415, 0.35355338
      %v1429 = vmul.f32 %v1418, 0.35355338
      %v1430 = vmul.f32 %v1423, 0.35355338
      %v1431 = vadd.f32 %v1428, %v914
      %v1432 = vadd.f32 %v1429, %v914
      %v1433 = vadd.f32 %v1430, %v914
      %v1434 = vsel %vm919, %v1431, -inf
      %1435 = vmax.xlane.f32.xlu0 %v1434
      %v1436 = vpop.xlane.xlu0 %1435
      %v1437 = vsel %vm919, %v1432, -inf
      %1438 = vmax.xlane.f32.xlu0 %v1437
      %v1439 = vpop.xlane.xlu0 %1438
      %v1440 = vsel %vm919, %v1433, -inf
      %1441 = vmax.xlane.f32.xlu0 %v1440
      %v1442 = vpop.xlane.xlu0 %1441
      %v1443 = vsub.f32 %v1431, %v1436
      %v1444 = vsub.f32 %v1432, %v1439
      %v1445 = vsub.f32 %v1433, %v1442
      %v1446 = vmul.f32 %v1443, 1.442695
      %v1447 = vpow.pop %v1446
      %v1448 = vmul.f32 %v1444, 1.442695
      %v1449 = vpow.pop %v1448
      %v1450 = vmul.f32 %v1445, 1.442695
      %v1451 = vpow.pop %v1450
      %v1452 = vsel %vm919, %v1447, 0.0
      %1453 = vadd.xlane.f32.xlu0 %v1452
      %v1454 = vpop.xlane.xlu0 %1453
      %v1455 = vsel %vm919, %v1449, 0.0
      %1456 = vadd.xlane.f32.xlu0 %v1455
      %v1457 = vpop.xlane.xlu0 %1456
      %v1458 = vsel %vm919, %v1451, 0.0
      %1459 = vadd.xlane.f32.xlu0 %v1458
      %v1460 = vpop.xlane.xlu0 %1459
      %v1461 = vrcp.pop %v1454
      %v1462 = vrcp.pop %v1457
      %v1463 = vrcp.pop %v1460
      %v1464 = vmul.f32 %v1447, %v1461
      %v1465 = vmul.f32 %v1449, %v1462
      %v1466 = vmul.f32 %v1451, %v1463
      %v1467 = vpack.c.bf16 %v1465, %v1464
      %v1468 = vpack.c.bf16 %v1466, %v1466
      %1469 = vrot.lane.b32.xlu0 %v838, 40
      %v1470 = vpop.permute.xlu0 %1469
      %1471 = vrot.lane.b32.xlu0 %v839, 40
      %v1472 = vpop.permute.xlu0 %1471
      %v1475 = vsel %vm919, %v1467, 0
      %v1478 = vsel %vm919, %v1468, 0
      %v1481 = vsel %vm966, %v1472, 0
      %1483 = vmatprep.subr.bf16.mxu0 0
      %1484 = vmatpush1.bf16.msra.mxu0 %v1470
      %1485 = vmatprep.subr.bf16.mxu0 0
      %1486 = vmatpush1.bf16.msra.mxu0 %v1481
      %1487 = vmatprep.subr.bf16.mxu0 0
      %1488 = vmatpush1.bf16.msra.mxu0 0
      %1489 = vmatprep.subr.bf16.mxu0 0
      %1490 = vmatpush1.bf16.msra.mxu0 0
      %1491 = vmatprep.subr.bf16.mxu0 0
      %1492 = vmatpush1.bf16.msra.mxu0 0
      %1493 = vmatprep.subr.bf16.mxu0 0
      %1494 = vmatpush1.bf16.msra.mxu0 0
      %1495 = vmatprep.subr.bf16.mxu0 0
      %1496 = vmatpush1.bf16.msra.mxu0 0
      %1497 = vmatprep.subr.bf16.mxu0 0
      %1498 = vmatpush1.bf16.msra.mxu0 0
      %1499 = vmatprep.subr.bf16.mxu0 0
      %1500 = vmatpush1.bf16.msra.mxu0 0
      %1501 = vmatprep.subr.bf16.mxu0 0
      %1502 = vmatpush1.bf16.msra.mxu0 0
      %1503 = vmatprep.subr.bf16.mxu0 0
      %1504 = vmatpush1.bf16.msra.mxu0 0
      %1505 = vmatprep.subr.bf16.mxu0 0
      %1506 = vmatpush1.bf16.msra.mxu0 0
      %1507 = vmatprep.subr.bf16.mxu0 0
      %1508 = vmatpush1.bf16.msra.mxu0 0
      %1509 = vmatprep.subr.bf16.mxu0 0
      %1510 = vmatpush1.bf16.msra.mxu0 0
      %1511 = vmatprep.subr.bf16.mxu0 0
      %1512 = vmatpush1.bf16.msra.mxu0 0
      %1513 = vmatprep.subr.bf16.mxu0 0
      %1514 = vmatpush1.bf16.msra.mxu0 0
      %1515 = vmatprep.mubr.bf16.mxu0 0
      %1516 = vmatmul.mubr.bf16.gmra.mrb[0].mxu0 %v1475
      %v1517 = vpop.f32.mrb[0].mxu0
      %v1518 = vadd.f32 0.0, %v1517
      %v1519 = vpop.f32.mrb[0].mxu0
      %v1520 = vpop.f32.mrb[0].mxu0
      %v1521 = vadd.f32 0.0, %v1520
      %v1522 = vpop.f32.mrb[0].mxu0
      %1523 = vmatprep.mubr.bf16.mxu0 0
      %1524 = vmatmul.mubr.bf16.gmra.mrb[0].mxu0 %v1478
      %v1525 = vpop.f32.mrb[0].mxu0
      %v1526 = vadd.f32 0.0, %v1525
      %v1527 = vpop.f32.mrb[0].mxu0
      %v1528 = vpop.f32.mrb[0].mxu0
      %v1529 = vpop.f32.mrb[0].mxu0
      %1530 = vdwg.mxu0
      %1534 = vrot.lane.b32.xlu0 %v1176, 8
      %v1535 = vpop.permute.xlu0 %1534
      %1536 = vrot.lane.b32.xlu0 %v1179, 8
      %v1537 = vpop.permute.xlu0 %1536
      %1538 = vrot.lane.b32.xlu0 %v1184, 8
      %v1539 = vpop.permute.xlu0 %1538
      %1546 = vrot.lane.b32.xlu0 %v1347, 16
      %v1547 = vpop.permute.xlu0 %1546
      %1548 = vrot.lane.b32.xlu0 %v1350, 16
      %v1549 = vpop.permute.xlu0 %1548
      %1550 = vrot.lane.b32.xlu0 %v1355, 16
      %v1551 = vpop.permute.xlu0 %1550
      %1558 = vrot.lane.b32.xlu0 %v1518, 24
      %v1559 = vpop.permute.xlu0 %1558
      %1560 = vrot.lane.b32.xlu0 %v1521, 24
      %v1561 = vpop.permute.xlu0 %1560
      %1562 = vrot.lane.b32.xlu0 %v1526, 24
      %v1563 = vpop.permute.xlu0 %1562
      %v1567 = vsel %vm846, %v1005, %v1535
      %v1568 = vsel %vm846, %v1008, %v1537
      %v1569 = vsel %vm846, %v1013, %v1539
      %vm1570 = vcmask 130048
      %v1571 = vsel %vm1570, %v1567, %v1547
      %v1572 = vsel %vm1570, %v1568, %v1549
      %v1573 = vsel %vm1570, %v1569, %v1551
      %v1574 = vsel %vm919, %v1571, %v1559
      %v1575 = vsel %vm919, %v1572, %v1561
      %v1576 = vsel %vm919, %v1573, %v1563
      %v1577 = vld [vmem:[%s585] sm:$0xf]
      %v1578 = vld [vmem:[%s585 + $0x4] sm:$0xf]
      %v1579 = vld [vmem:[%s585 + $0x8] sm:$0xf]
      %v1580 = vld [vmem:[%s585 + $0xc] sm:$0xf]
      %v1581 = vpack.c.bf16 %v1575, %v1574
      %v1582 = vpack.c.bf16 %v1576, %v1576
      %v1583 = vlaneseq
      %v1584 = vshrl.u32 %v1583, 7
      %v1585 = vsub.s32 3, %v1584
      %v1586 = vrot.slane %v701, %v1585
      %v1591 = vunpack.c.l.b16 %v1577
      %v1592 = vunpack.c.l.b16 %v1578
      %v1593 = vunpack.c.l.b16 %v1579
      %v1594 = vunpack.c.l.b16 %v1580
      %v1595 = vpack.c.b16 %v1592, %v1591
      %v1596 = vpack.c.b16 %v1594, %v1593
      %v1600 = vsel %vm707, %v1581, 0
      %v1603 = vsel %vm707, %v1582, 0
      %1605 = vmatprep.subr.bf16.mxu0 0
      %1606 = vmatpush1.bf16.msra.mxu0 %v1595
      %1607 = vmatprep.subr.bf16.mxu0 0
      %1608 = vmatpush1.bf16.msra.mxu0 %v1596
      %1609 = vmatprep.subr.bf16.mxu0 0
      %1610 = vmatpush1.bf16.msra.mxu0 0
      %1611 = vmatprep.subr.bf16.mxu0 0
      %1612 = vmatpush1.bf16.msra.mxu0 0
      %1613 = vmatprep.subr.bf16.mxu0 0
      %1614 = vmatpush1.bf16.msra.mxu0 0
      %1615 = vmatprep.subr.bf16.mxu0 0
      %1616 = vmatpush1.bf16.msra.mxu0 0
      %1617 = vmatprep.subr.bf16.mxu0 0
      %1618 = vmatpush1.bf16.msra.mxu0 0
      %1619 = vmatprep.subr.bf16.mxu0 0
      %1620 = vmatpush1.bf16.msra.mxu0 0
      %1621 = vmatprep.subr.bf16.mxu0 0
      %1622 = vmatpush1.bf16.msra.mxu0 0
      %1623 = vmatprep.subr.bf16.mxu0 0
      %1624 = vmatpush1.bf16.msra.mxu0 0
      %1625 = vmatprep.subr.bf16.mxu0 0
      %1626 = vmatpush1.bf16.msra.mxu0 0
      %1627 = vmatprep.subr.bf16.mxu0 0
      %1628 = vmatpush1.bf16.msra.mxu0 0
      %1629 = vmatprep.subr.bf16.mxu0 0
      %1630 = vmatpush1.bf16.msra.mxu0 0
      %1631 = vmatprep.subr.bf16.mxu0 0
      %1632 = vmatpush1.bf16.msra.mxu0 0
      %1633 = vmatprep.subr.bf16.mxu0 0
      %1634 = vmatpush1.bf16.msra.mxu0 0
      %1635 = vmatprep.subr.bf16.mxu0 0
      %1636 = vmatpush1.bf16.msra.mxu0 0
      %1637 = vmatprep.mubr.bf16.mxu0 0
      %1638 = vmatmul.mubr.bf16.gmra.mrb[0].mxu0 %v1600
      %v1639 = vpop.f32.mrb[0].mxu0
      %v1640 = vadd.f32 %v1586, %v1639
      %v1641 = vpop.f32.mrb[0].mxu0
      %v1642 = vpop.f32.mrb[0].mxu0
      %v1643 = vadd.f32 %v1586, %v1642
      %v1644 = vpop.f32.mrb[0].mxu0
      %1645 = vmatprep.mubr.bf16.mxu0 0
      %1646 = vmatmul.mubr.bf16.gmra.mrb[0].mxu0 %v1603
      %v1647 = vpop.f32.mrb[0].mxu0
      %v1648 = vadd.f32 %v1586, %v1647
      %v1649 = vpop.f32.mrb[0].mxu0
      %v1650 = vpop.f32.mrb[0].mxu0
      %v1651 = vpop.f32.mrb[0].mxu0
      %1652 = vdwg.mxu0
      %v1653 = vlaneseq
      %v1654 = vshrl.u32 %v1653, 7
      %v1655 = vsub.s32 4, %v1654
      %v1656 = vrot.slane %v701, %v1655
      %v1657 = vmul.f32 %v1656, %v1640
      %v1658 = vmul.f32 %v1656, %v1643
      %v1659 = vmul.f32 %v1656, %v1648
      %v1660 = vadd.f32 %v703, %v1657
      %v1661 = vadd.f32 %v704, %v1658
      %v1662 = vadd.f32 %v705, %v1659
      %v1663 = vsel %vm707, %v1660, 0.0
      %1664 = vadd.xlane.f32.xlu0 %v1663
      %v1665 = vpop.xlane.xlu0 %1664
      %v1666 = vsel %vm707, %v1661, 0.0
      %1667 = vadd.xlane.f32.xlu0 %v1666
      %v1668 = vpop.xlane.xlu0 %1667
      %v1669 = vsel %vm707, %v1662, 0.0
      %1670 = vadd.xlane.f32.xlu0 %v1669
      %v1671 = vpop.xlane.xlu0 %1670
      %v1672 = vmul.f32 %v1665, %v717
      %v1673 = vmul.f32 %v1668, %v717
      %v1674 = vmul.f32 %v1671, %v717
      %v1675 = vsub.f32 %v1660, %v1672
      %v1676 = vsub.f32 %v1661, %v1673
      %v1677 = vsub.f32 %v1662, %v1674
      %v1678 = vmul.f32 %v1675, %v1675
      %v1679 = vmul.f32 %v1676, %v1676
      %v1680 = vmul.f32 %v1677, %v1677
      %v1681 = vsel %vm707, %v1678, 0.0
      %1682 = vadd.xlane.f32.xlu0 %v1681
      %v1683 = vpop.xlane.xlu0 %1682
      %v1684 = vsel %vm707, %v1679, 0.0
      %1685 = vadd.xlane.f32.xlu0 %v1684
      %v1686 = vpop.xlane.xlu0 %1685
      %v1687 = vsel %vm707, %v1680, 0.0
      %1688 = vadd.xlane.f32.xlu0 %v1687
      %v1689 = vpop.xlane.xlu0 %1688
      %v1690 = vmul.f32 %v1683, %v717
      %v1691 = vmul.f32 %v1686, %v717
      %v1692 = vmul.f32 %v1689, %v717
      %v1693 = vadd.f32 %v1690, 1e-06
      %v1694 = vadd.f32 %v1691, 1e-06
      %v1695 = vadd.f32 %v1692, 1e-06
      %v1696 = vrsqrt.pop %v1693
      %v1697 = vrsqrt.pop %v1694
      %v1698 = vrsqrt.pop %v1695
      %v1699 = vmul.f32 %v1675, %v1696
      %v1700 = vmul.f32 %v1676, %v1697
      %v1701 = vmul.f32 %v1677, %v1698
      %v1702 = vlaneseq
      %v1703 = vshrl.u32 %v1702, 7
      %v1704 = vsub.s32 5, %v1703
      %v1705 = vrot.slane %v701, %v1704
      %v1706 = vmul.f32 %v1699, %v1705
      %v1707 = vmul.f32 %v1700, %v1705
      %v1708 = vmul.f32 %v1701, %v1705
      %v1709 = vlaneseq
      %v1710 = vshrl.u32 %v1709, 7
      %v1711 = vsub.s32 6, %v1710
      %v1712 = vrot.slane %v701, %v1711
      %v1713 = vadd.f32 %v1706, %v1712
      %v1714 = vadd.f32 %v1707, %v1712
      %v1715 = vadd.f32 %v1708, %v1712
      %v1716 = vld [vmem:[%s590] sm:$0xf]
      %v1717 = vld [vmem:[%s590 + $0x4] sm:$0xf]
      %v1718 = vld [vmem:[%s590 + $0x8] sm:$0xf]
      %v1719 = vld [vmem:[%s590 + $0xc] sm:$0xf]
      %v1720 = vpack.c.bf16 %v1714, %v1713
      %v1721 = vpack.c.bf16 %v1715, %v1715
      %v1722 = vlaneseq
      %v1723 = vshrl.u32 %v1722, 7
      %v1724 = vsub.s32 7, %v1723
      %v1725 = vrot.slane %v701, %v1724
      %v1730 = vunpack.c.l.b16 %v1716
      %v1731 = vunpack.c.l.b16 %v1717
      %v1732 = vunpack.c.l.b16 %v1718
      %v1733 = vunpack.c.l.b16 %v1719
      %v1734 = vpack.c.b16 %v1731, %v1730
      %v1735 = vpack.c.b16 %v1733, %v1732
      %v1739 = vsel %vm707, %v1720, 0
      %v1742 = vsel %vm707, %v1721, 0
      %1744 = vmatprep.subr.bf16.mxu0 0
      %1745 = vmatpush1.bf16.msra.mxu0 %v1734
      %1746 = vmatprep.subr.bf16.mxu0 0
      %1747 = vmatpush1.bf16.msra.mxu0 %v1735
      %1748 = vmatprep.subr.bf16.mxu0 0
      %1749 = vmatpush1.bf16.msra.mxu0 0
      %1750 = vmatprep.subr.bf16.mxu0 0
      %1751 = vmatpush1.bf16.msra.mxu0 0
      %1752 = vmatprep.subr.bf16.mxu0 0
      %1753 = vmatpush1.bf16.msra.mxu0 0
      %1754 = vmatprep.subr.bf16.mxu0 0
      %1755 = vmatpush1.bf16.msra.mxu0 0
      %1756 = vmatprep.subr.bf16.mxu0 0
      %1757 = vmatpush1.bf16.msra.mxu0 0
      %1758 = vmatprep.subr.bf16.mxu0 0
      %1759 = vmatpush1.bf16.msra.mxu0 0
      %1760 = vmatprep.subr.bf16.mxu0 0
      %1761 = vmatpush1.bf16.msra.mxu0 0
      %1762 = vmatprep.subr.bf16.mxu0 0
      %1763 = vmatpush1.bf16.msra.mxu0 0
      %1764 = vmatprep.subr.bf16.mxu0 0
      %1765 = vmatpush1.bf16.msra.mxu0 0
      %1766 = vmatprep.subr.bf16.mxu0 0
      %1767 = vmatpush1.bf16.msra.mxu0 0
      %1768 = vmatprep.subr.bf16.mxu0 0
      %1769 = vmatpush1.bf16.msra.mxu0 0
      %1770 = vmatprep.subr.bf16.mxu0 0
      %1771 = vmatpush1.bf16.msra.mxu0 0
      %1772 = vmatprep.subr.bf16.mxu0 0
      %1773 = vmatpush1.bf16.msra.mxu0 0
      %1774 = vmatprep.subr.bf16.mxu0 0
      %1775 = vmatpush1.bf16.msra.mxu0 0
      %1776 = vmatprep.mubr.bf16.mxu0 0
      %1777 = vmatmul.mubr.bf16.gmra.mrb[0].mxu0 %v1739
      %v1778 = vpop.f32.mrb[0].mxu0
      %v1779 = vadd.f32 %v1725, %v1778
      %v1780 = vpop.f32.mrb[0].mxu0
      %v1781 = vpop.f32.mrb[0].mxu0
      %v1782 = vadd.f32 %v1725, %v1781
      %v1783 = vpop.f32.mrb[0].mxu0
      %1784 = vmatprep.mubr.bf16.mxu0 0
      %1785 = vmatmul.mubr.bf16.gmra.mrb[0].mxu0 %v1742
      %v1786 = vpop.f32.mrb[0].mxu0
      %v1787 = vadd.f32 %v1725, %v1786
      %v1788 = vpop.f32.mrb[0].mxu0
      %v1789 = vpop.f32.mrb[0].mxu0
      %v1790 = vpop.f32.mrb[0].mxu0
      %1791 = vdwg.mxu0
      %v1792 = vmul.f32 %v1779, %v1779
      %v1793 = vmul.f32 %v1782, %v1782
      %v1794 = vmul.f32 %v1787, %v1787
      %v1795 = vmul.f32 %v1779, %v1792
      %v1796 = vmul.f32 %v1782, %v1793
      %v1797 = vmul.f32 %v1787, %v1794
      %v1798 = vmul.f32 %v1795, 0.044715
      %v1799 = vmul.f32 %v1796, 0.044715
      %v1800 = vmul.f32 %v1797, 0.044715
      %v1801 = vadd.f32 %v1779, %v1798
      %v1802 = vadd.f32 %v1782, %v1799
      %v1803 = vadd.f32 %v1787, %v1800
      %v1804 = vmul.f32 %v1801, 0.7978846
      %v1805 = vmul.f32 %v1802, 0.7978846
      %v1806 = vmul.f32 %v1803, 0.7978846
      %v1807 = vtanh.pop %v1804
      %v1808 = vtanh.pop %v1805
      %v1809 = vtanh.pop %v1806
      %v1810 = vadd.f32 %v1807, 1.0
      %v1811 = vadd.f32 %v1808, 1.0
      %v1812 = vadd.f32 %v1809, 1.0
      %v1813 = vmul.f32 %v1810, 0.5
      %v1814 = vmul.f32 %v1811, 0.5
      %v1815 = vmul.f32 %v1812, 0.5
      %v1816 = vmul.f32 %v1779, %v1813
      %v1817 = vmul.f32 %v1782, %v1814
      %v1818 = vmul.f32 %v1787, %v1815
      %v1819 = vld [vmem:[%s595] sm:$0xf]
      %v1820 = vld [vmem:[%s595 + $0x4] sm:$0xf]
      %v1821 = vld [vmem:[%s595 + $0x8] sm:$0xf]
      %v1822 = vld [vmem:[%s595 + $0xc] sm:$0xf]
      %v1823 = vld [vmem:[%s595 + $0x10] sm:$0xf]
      %v1824 = vld [vmem:[%s595 + $0x14] sm:$0xf]
      %v1825 = vld [vmem:[%s595 + $0x18] sm:$0xf]
      %v1826 = vld [vmem:[%s595 + $0x1c] sm:$0xf]
      %v1827 = vld [vmem:[%s595 + $0x20] sm:$0xf]
      %v1828 = vld [vmem:[%s595 + $0x24] sm:$0xf]
      %v1829 = vld [vmem:[%s595 + $0x28] sm:$0xf]
      %v1830 = vld [vmem:[%s595 + $0x2c] sm:$0xf]
      %v1831 = vld [vmem:[%s595 + $0x30] sm:$0xf]
      %v1832 = vld [vmem:[%s595 + $0x34] sm:$0xf]
      %v1833 = vld [vmem:[%s595 + $0x38] sm:$0xf]
      %v1834 = vld [vmem:[%s595 + $0x3c] sm:$0xf]
      %v1835 = vpack.c.bf16 %v1817, %v1816
      %v1836 = vpack.c.bf16 %v1818, %v1818
      %v1837 = vlaneseq
      %v1838 = vshrl.u32 %v1837, 7
      %v1839 = vsub.s32 0, %v1838
      %v1840 = vrot.slane %v702, %v1839
      %v1857 = vunpack.c.l.b16 %v1819
      %v1858 = vunpack.c.l.b16 %v1820
      %v1859 = vunpack.c.l.b16 %v1821
      %v1860 = vunpack.c.l.b16 %v1822
      %v1861 = vunpack.c.l.b16 %v1823
      %v1862 = vunpack.c.l.b16 %v1824
      %v1863 = vunpack.c.l.b16 %v1825
      %v1864 = vunpack.c.l.b16 %v1826
      %v1865 = vunpack.c.l.b16 %v1827
      %v1866 = vunpack.c.l.b16 %v1828
      %v1867 = vunpack.c.l.b16 %v1829
      %v1868 = vunpack.c.l.b16 %v1830
      %v1869 = vunpack.c.l.b16 %v1831
      %v1870 = vunpack.c.l.b16 %v1832
      %v1871 = vunpack.c.l.b16 %v1833
      %v1872 = vunpack.c.l.b16 %v1834
      %v1873 = vpack.c.b16 %v1858, %v1857
      %v1874 = vpack.c.b16 %v1860, %v1859
      %v1875 = vpack.c.b16 %v1862, %v1861
      %v1876 = vpack.c.b16 %v1864, %v1863
      %v1877 = vpack.c.b16 %v1866, %v1865
      %v1878 = vpack.c.b16 %v1868, %v1867
      %v1879 = vpack.c.b16 %v1870, %v1869
      %v1880 = vpack.c.b16 %v1872, %v1871
      %1889 = vmatprep.subr.bf16.mxu0 0
      %1890 = vmatpush1.bf16.msra.mxu0 %v1873
      %1891 = vmatprep.subr.bf16.mxu0 0
      %1892 = vmatpush1.bf16.msra.mxu0 %v1874
      %1893 = vmatprep.subr.bf16.mxu0 0
      %1894 = vmatpush1.bf16.msra.mxu0 %v1875
      %1895 = vmatprep.subr.bf16.mxu0 0
      %1896 = vmatpush1.bf16.msra.mxu0 %v1876
      %1897 = vmatprep.subr.bf16.mxu0 0
      %1898 = vmatpush1.bf16.msra.mxu0 %v1877
      %1899 = vmatprep.subr.bf16.mxu0 0
      %1900 = vmatpush1.bf16.msra.mxu0 %v1878
      %1901 = vmatprep.subr.bf16.mxu0 0
      %1902 = vmatpush1.bf16.msra.mxu0 %v1879
      %1903 = vmatprep.subr.bf16.mxu0 0
      %1904 = vmatpush1.bf16.msra.mxu0 %v1880
      %1905 = vmatprep.subr.bf16.mxu0 0
      %1906 = vmatpush1.bf16.msra.mxu0 0
      %1907 = vmatprep.subr.bf16.mxu0 0
      %1908 = vmatpush1.bf16.msra.mxu0 0
      %1909 = vmatprep.subr.bf16.mxu0 0
      %1910 = vmatpush1.bf16.msra.mxu0 0
      %1911 = vmatprep.subr.bf16.mxu0 0
      %1912 = vmatpush1.bf16.msra.mxu0 0
      %1913 = vmatprep.subr.bf16.mxu0 0
      %1914 = vmatpush1.bf16.msra.mxu0 0
      %1915 = vmatprep.subr.bf16.mxu0 0
      %1916 = vmatpush1.bf16.msra.mxu0 0
      %1917 = vmatprep.subr.bf16.mxu0 0
      %1918 = vmatpush1.bf16.msra.mxu0 0
      %1919 = vmatprep.subr.bf16.mxu0 0
      %1920 = vmatpush1.bf16.msra.mxu0 0
      %1921 = vmatprep.mubr.bf16.mxu0 0
      %1922 = vmatmul.mubr.bf16.gmra.mrb[0].mxu0 %v1835
      %v1923 = vpop.f32.mrb[0].mxu0
      %v1924 = vadd.f32 %v1840, %v1923
      %v1925 = vpop.f32.mrb[0].mxu0
      %v1926 = vpop.f32.mrb[0].mxu0
      %v1927 = vadd.f32 %v1840, %v1926
      %v1928 = vpop.f32.mrb[0].mxu0
      %1929 = vmatprep.mubr.bf16.mxu0 0
      %1930 = vmatmul.mubr.bf16.gmra.mrb[0].mxu0 %v1836
      %v1931 = vpop.f32.mrb[0].mxu0
      %v1932 = vadd.f32 %v1840, %v1931
      %v1933 = vpop.f32.mrb[0].mxu0
      %v1934 = vpop.f32.mrb[0].mxu0
      %v1935 = vpop.f32.mrb[0].mxu0
      %1936 = vdwg.mxu0
      %v1937 = vlaneseq
      %v1938 = vshrl.u32 %v1937, 7
      %v1939 = vsub.s32 1, %v1938
      %v1940 = vrot.slane %v702, %v1939
      %v1941 = vmul.f32 %v1940, %v1924
      %v1942 = vmul.f32 %v1940, %v1927
      %v1943 = vmul.f32 %v1940, %v1932
      %v1944 = vadd.f32 %v1660, %v1941
      %v1945 = vadd.f32 %v1661, %v1942
      %v1946 = vadd.f32 %v1662, %v1943
      %1947 = vst.msk [vmem:[#allocation2] sm:$0xff] %vm707, %v1944
      %1948 = vst.msk [vmem:[#allocation2 + $0x8] sm:$0xff] %vm707, %v1945
      %1949 = vst.msk [vmem:[#allocation2 + $0x10] sm:$0xff] %vm707, %v1946
      %p1950 = scmp.eq.s32.totalorder %s31, 1
      // Predicated region
      $region85: #{custom_dino_forward.1} parent=79 // pred_check
        %p1951 = pneg %p1950
      $region86: #{custom_dino_forward.1} parent=79 // pred_check_branch
        %1953 = sbr.rel (%p1951) target = $region88
      $region87: #{custom_dino_forward.1} parent=79 // pred_region
        %v1954 = vld [vmem:[%s9] sm:$0x1]
        %v1955 = vld [vmem:[%s10] sm:$0x1]
        %v1956 = vsel %vm707, %v1944, 0.0
        %1957 = vadd.xlane.f32.xlu0 %v1956
        %v1958 = vpop.xlane.xlu0 %1957
        %v1959 = vmul.f32 %v1958, %v717
        %v1960 = vsub.f32 %v1944, %v1959
        %v1961 = vmul.f32 %v1960, %v1960
        %v1962 = vsel %vm707, %v1961, 0.0
        %1963 = vadd.xlane.f32.xlu0 %v1962
        %v1964 = vpop.xlane.xlu0 %1963
        %v1965 = vmul.f32 %v1964, %v717
        %v1966 = vadd.f32 %v1965, 1e-06
        %v1967 = vrsqrt.pop %v1966
        %v1968 = vmul.f32 %v1960, %v1967
        %v1970 = vlaneseq
        %v1971 = vshrl.u32 %v1970, 7
        %v1972 = vsub.s32 0, %v1971
        %v1973 = vrot.slane %v1954, %v1972
        %v1975 = vmul.f32 %v1968, %v1973
        %v1977 = vlaneseq
        %v1978 = vshrl.u32 %v1977, 7
        %v1979 = vsub.s32 0, %v1978
        %v1980 = vrot.slane %v1955, %v1979
        %v1982 = vadd.f32 %v1975, %v1980
        %v1983 = vld [vmem:[%s11] sm:$0xf]
        %v1984 = vld [vmem:[%s11 + $0x4] sm:$0xf]
        %v1985 = vld [vmem:[%s11 + $0x8] sm:$0xf]
        %v1986 = vld [vmem:[%s11 + $0xc] sm:$0xf]
        %v1987 = vpack.c.bf16 %v1982, %v1982
        %v1988 = vld [vmem:[%s12] sm:$0x1]
        %v1990 = vlaneseq
        %v1991 = vshrl.u32 %v1990, 7
        %v1992 = vsub.s32 0, %v1991
        %v1993 = vrot.slane %v1988, %v1992
        %v1999 = vunpack.c.l.b16 %v1983
        %v2000 = vunpack.c.l.b16 %v1984
        %v2001 = vunpack.c.l.b16 %v1985
        %v2002 = vunpack.c.l.b16 %v1986
        %v2003 = vpack.c.b16 %v2000, %v1999
        %v2004 = vpack.c.b16 %v2002, %v2001
        %v2008 = vsel %vm707, %v1987, 0
        %2010 = vmatprep.subr.bf16.mxu0 0
        %2011 = vmatpush1.bf16.msra.mxu0 %v2003
        %2012 = vmatprep.subr.bf16.mxu0 0
        %2013 = vmatpush1.bf16.msra.mxu0 %v2004
        %2014 = vmatprep.subr.bf16.mxu0 0
        %2015 = vmatpush1.bf16.msra.mxu0 0
        %2016 = vmatprep.subr.bf16.mxu0 0
        %2017 = vmatpush1.bf16.msra.mxu0 0
        %2018 = vmatprep.subr.bf16.mxu0 0
        %2019 = vmatpush1.bf16.msra.mxu0 0
        %2020 = vmatprep.subr.bf16.mxu0 0
        %2021 = vmatpush1.bf16.msra.mxu0 0
        %2022 = vmatprep.subr.bf16.mxu0 0
        %2023 = vmatpush1.bf16.msra.mxu0 0
        %2024 = vmatprep.subr.bf16.mxu0 0
        %2025 = vmatpush1.bf16.msra.mxu0 0
        %2026 = vmatprep.subr.bf16.mxu0 0
        %2027 = vmatpush1.bf16.msra.mxu0 0
        %2028 = vmatprep.subr.bf16.mxu0 0
        %2029 = vmatpush1.bf16.msra.mxu0 0
        %2030 = vmatprep.subr.bf16.mxu0 0
        %2031 = vmatpush1.bf16.msra.mxu0 0
        %2032 = vmatprep.subr.bf16.mxu0 0
        %2033 = vmatpush1.bf16.msra.mxu0 0
        %2034 = vmatprep.subr.bf16.mxu0 0
        %2035 = vmatpush1.bf16.msra.mxu0 0
        %2036 = vmatprep.subr.bf16.mxu0 0
        %2037 = vmatpush1.bf16.msra.mxu0 0
        %2038 = vmatprep.subr.bf16.mxu0 0
        %2039 = vmatpush1.bf16.msra.mxu0 0
        %2040 = vmatprep.subr.bf16.mxu0 0
        %2041 = vmatpush1.bf16.msra.mxu0 0
        %2042 = vmatprep.mubr.bf16.mxu0 0
        %2043 = vmatmul.mubr.bf16.gmra.mrb[0].mxu0 %v2008
        %v2044 = vpop.f32.mrb[0].mxu0
        %v2045 = vadd.f32 %v1993, %v2044
        %v2046 = vpop.f32.mrb[0].mxu0
        %v2047 = vpop.f32.mrb[0].mxu0
        %v2048 = vpop.f32.mrb[0].mxu0
        %2049 = vdwg.mxu0
        %v2050 = vtanh.pop %v2045
        %v2051 = vld [vmem:[%s13] sm:$0xf]
        %v2052 = vld [vmem:[%s13 + $0x4] sm:$0xf]
        %v2053 = vld [vmem:[%s13 + $0x8] sm:$0xf]
        %v2054 = vld [vmem:[%s13 + $0xc] sm:$0xf]
        %v2055 = vpack.c.bf16 %v2050, %v2050
        %v2056 = vld [vmem:[%s14] sm:$0x1]
        %v2058 = vlaneseq
        %v2059 = vshrl.u32 %v2058, 7
        %v2060 = vsub.s32 0, %v2059
        %v2061 = vrot.slane %v2056, %v2060
        %v2067 = vunpack.c.l.b16 %v2051
        %v2068 = vunpack.c.l.b16 %v2052
        %v2069 = vunpack.c.l.b16 %v2053
        %v2070 = vunpack.c.l.b16 %v2054
        %v2071 = vpack.c.b16 %v2068, %v2067
        %v2072 = vpack.c.b16 %v2070, %v2069
        %v2076 = vsel %vm707, %v2055, 0
        %2078 = vmatprep.subr.bf16.mxu0 0
        %2079 = vmatpush1.bf16.msra.mxu0 %v2071
        %2080 = vmatprep.subr.bf16.mxu0 0
        %2081 = vmatpush1.bf16.msra.mxu0 %v2072
        %2082 = vmatprep.subr.bf16.mxu0 0
        %2083 = vmatpush1.bf16.msra.mxu0 0
        %2084 = vmatprep.subr.bf16.mxu0 0
        %2085 = vmatpush1.bf16.msra.mxu0 0
        %2086 = vmatprep.subr.bf16.mxu0 0
        %2087 = vmatpush1.bf16.msra.mxu0 0
        %2088 = vmatprep.subr.bf16.mxu0 0
        %2089 = vmatpush1.bf16.msra.mxu0 0
        %2090 = vmatprep.subr.bf16.mxu0 0
        %2091 = vmatpush1.bf16.msra.mxu0 0
        %2092 = vmatprep.subr.bf16.mxu0 0
        %2093 = vmatpush1.bf16.msra.mxu0 0
        %2094 = vmatprep.subr.bf16.mxu0 0
        %2095 = vmatpush1.bf16.msra.mxu0 0
        %2096 = vmatprep.subr.bf16.mxu0 0
        %2097 = vmatpush1.bf16.msra.mxu0 0
        %2098 = vmatprep.subr.bf16.mxu0 0
        %2099 = vmatpush1.bf16.msra.mxu0 0
        %2100 = vmatprep.subr.bf16.mxu0 0
        %2101 = vmatpush1.bf16.msra.mxu0 0
        %2102 = vmatprep.subr.bf16.mxu0 0
        %2103 = vmatpush1.bf16.msra.mxu0 0
        %2104 = vmatprep.subr.bf16.mxu0 0
        %2105 = vmatpush1.bf16.msra.mxu0 0
        %2106 = vmatprep.subr.bf16.mxu0 0
        %2107 = vmatpush1.bf16.msra.mxu0 0
        %2108 = vmatprep.subr.bf16.mxu0 0
        %2109 = vmatpush1.bf16.msra.mxu0 0
        %2110 = vmatprep.mubr.bf16.mxu0 0
        %2111 = vmatmul.mubr.bf16.gmra.mrb[0].mxu0 %v2076
        %v2112 = vpop.f32.mrb[0].mxu0
        %v2113 = vadd.f32 %v2061, %v2112
        %v2114 = vpop.f32.mrb[0].mxu0
        %v2115 = vpop.f32.mrb[0].mxu0
        %v2116 = vpop.f32.mrb[0].mxu0
        %2117 = vdwg.mxu0
        %v2118 = vlaneseq
        %v2119 = vand.u32 %v2118, 127
        %vm2120 = vcmp.ge.s32.totalorder %v2119, 3
        %v2121 = vmax.f32 %v2113, 0.0
        %v2122 = vsel %vm2120, %v2121, %v2113
        %2123 = vst [vmem:[%s604] sm:$0xff] %v2122
      $region88: #{custom_dino_forward.1} parent=79 // pred_fallthru
        _
      %p2124 = scmp.lt.s32.totalorder %s30, 1
      %s2125 = scalar_select %p2124, %s30, 1
      %s2126 = smul.addr %s2125, 8
      %s2127 = scalar_lea.vmem %s15, %s2126
      // Predicated region
      $region89: #{custom_dino_forward.1} parent=79 // pred_check
        %p2128 = pneg %p401
      $region90: #{custom_dino_forward.1} parent=79 // pred_check_branch
        %2130 = sbr.rel (%p2128) target = $region92
      $region91: #{custom_dino_forward.1} parent=79 // pred_region
        _
      $region92: #{custom_dino_forward.1} parent=79 // pred_fallthru
        _
    $region80: #{custom_dino_forward.1} parent=5 // pred_fallthru
      _
    %p2131 = scmp.le.s32.totalorder 2, %s21
    // Predicated region
    $region93: #{custom_dino_forward.1} parent=5 // pred_check
      %p2132 = pneg %p2131
    $region94: #{custom_dino_forward.1} parent=5 // pred_check_branch
      %2134 = sbr.rel (%p2132) target = $region96
    $region95: #{custom_dino_forward.1} parent=5 // pred_region
      %s2135 = ssub.s32 %s21, 2
      // Predicated region
      $region97: #{custom_dino_forward.1} parent=95 // pred_check
        %p2136 = pneg %p407
      $region98: #{custom_dino_forward.1} parent=95 // pred_check_branch
        %2138 = sbr.rel (%p2136) target = $region100
      $region99: #{custom_dino_forward.1} parent=95 // pred_region
        %p2139 = scmp.lt.s32.totalorder %s32, 1
        %s2140 = scalar_select %p2139, %s32, 1
        %s2141 = smul.addr %s2140, 8
        %s2142 = scalar_lea.vmem %s15, %s2141
      $region100: #{custom_dino_forward.1} parent=95 // pred_fallthru
        _
    $region96: #{custom_dino_forward.1} parent=5 // pred_fallthru
      _
  $region6: #{custom_dino_forward.1} parent=0 // loop_footer
    %s25 = sadd.s32 1, %s21
  $region7: #{custom_dino_forward.1} parent=0 // loop_footer_branch
    %20 = sbr.rel target = $region3
  $region8: #{custom_dino_forward.1} parent=0 // loop_exit
    _

</llo_original>
